<compile_context>
chip_gen: v7x
topology: tpu7x:2x2x1
jax: 0.10.0
libtpu: 0.0.40
codegen_flags: <defaults>
</compile_context>

<pallas_src>
import math
import functools

import jax
import jax.numpy as jnp
from jax import lax
from jax.experimental import pallas as pl
from jax.experimental.pallas import tpu as pltpu


def _gelu_tanh(x):
    # tanh-approx GELU (EUP tanh); deviates from exact-erf GELU by < ~1e-3 abs.
    c = math.sqrt(2.0 / math.pi)
    return 0.5 * x * (1.0 + jnp.tanh(c * (x + 0.044715 * x * x * x)))


def _layernorm(x, gamma, beta, eps=1e-5):
    mu = jnp.mean(x, axis=-1, keepdims=True)
    xc = x - mu
    var = jnp.mean(xc * xc, axis=-1, keepdims=True)
    return xc * lax.rsqrt(var + eps) * gamma + beta


# ----------------------------------------------------------------------------
# Hardware-aware helpers
# ----------------------------------------------------------------------------
def _tpu_vmem_capacity_bytes():
    try:
        return int(pltpu.get_tpu_info().vmem_capacity_bytes)
    except Exception:
        return 128 * 1024 * 1024   # v5e/v6e default if query unavailable


@functools.lru_cache(maxsize=None)
def _single_buffer_ok():
    # Probe pipeline_mode=pl.Buffered(1) on a constant-index block once; fall back
    # to default double buffering if this JAX version rejects it.
    try:
        def _probe(a_ref, o_ref):
            o_ref[...] = a_ref[...] * 2.0
        spec = pl.BlockSpec((8, 128), lambda i: (0, 0), pipeline_mode=pl.Buffered(1))
        out = pl.pallas_call(
            _probe,
            out_shape=jax.ShapeDtypeStruct((8, 128), jnp.float32),
            grid=(1,),
            in_specs=[spec],
            out_specs=pl.BlockSpec((8, 128), lambda i: (0, 0)),
        )(jnp.ones((8, 128), jnp.float32))
        out = jax.block_until_ready(out)
        return bool(jnp.all(out == 2.0))
    except Exception:
        return False


def _const_block_spec(shape, index_map):
    # Constant-index block: DMA'd once; single-buffer it when supported to halve
    # its resident VMEM footprint.
    if _single_buffer_ok():
        return pl.BlockSpec(shape, index_map, pipeline_mode=pl.Buffered(1))
    return pl.BlockSpec(shape, index_map)


def _pick_tile(total, limit, align):
    if total <= limit:
        return total
    t = (limit // align) * align
    while t >= align:
        if total % t == 0:
            return t
        t -= align
    return total


# ----------------------------------------------------------------------------
# Kernel 1: pre-norm multi-head attention + residual
# ----------------------------------------------------------------------------
def attention_kernel(x_ref, g1_ref, b1_ref, wqkv_ref, bqkv_ref, wo_ref, bo_ref,
                     x1_ref, qkv_s, ctx_s, *, num_heads):
    x = x_ref[0]                                   # (S, D) f32 residual stream
    S, D = x.shape
    dh = D // num_heads

    xn = _layernorm(x, g1_ref[0], b1_ref[0]).astype(jnp.bfloat16)

    # Fused QKV projection: one full-width (S,D)@(D,3D) bf16 matmul.
    # 1/sqrt(dh) is already folded into the Q columns of wqkv/bqkv (wrapper).
    qkv = jnp.dot(xn, wqkv_ref[...], preferred_element_type=jnp.float32) + bqkv_ref[...]
    qkv_s[...] = qkv.astype(jnp.bfloat16)

    # TODO(synk): for H >= 16 use lax.fori_loop over heads (dynamic lane offsets)
    # to bound vreg live ranges; static unroll is fine at small H.
    for h in range(num_heads):
        q = qkv_s[:, h * dh:(h + 1) * dh]                      # (S, dh) bf16
        k = qkv_s[:, D + h * dh:D + (h + 1) * dh]
        v = qkv_s[:, 2 * D + h * dh:2 * D + (h + 1) * dh]

        s = lax.dot_general(q, k, (((1,), (1,)), ((), ())),
                            preferred_element_type=jnp.float32)  # (S, S) f32
        s = s - jnp.max(s, axis=-1, keepdims=True)
        # bf16 exp relieves the EUP slot on v6e/v7x; denominator summed in f32.
        e = jnp.exp(s.astype(jnp.bfloat16))
        denom = jnp.sum(e.astype(jnp.float32), axis=-1, keepdims=True)
        p = e * pl.reciprocal(denom, approx=True).astype(jnp.bfloat16)

        ctx = jnp.dot(p, v, preferred_element_type=jnp.float32)  # (S, dh)
        # Static lane-offset store: builds the head-concatenated (S, D) context.
        ctx_s[:, h * dh:(h + 1) * dh] = ctx.astype(jnp.bfloat16)

    # Single full-K out-projection instead of H rank-dh accumulations.
    attn = jnp.dot(ctx_s[...], wo_ref[...], preferred_element_type=jnp.float32)
    x1_ref[0] = (x + attn + bo_ref[...]).astype(x1_ref.dtype)


# ----------------------------------------------------------------------------
# Kernel 2: pre-norm FFN + residual over the flattened (B*S, D) row slab
# ----------------------------------------------------------------------------
def ffn_kernel(x1_ref, g2_ref, b2_ref, w1_ref, b1_ref, w2_ref, bf2_ref,
               o_ref, xn2_s, acc_s):
    f = pl.program_id(1)

    # NOTE: correctness relies on the F axis being the *inner*, "arbitrary" grid
    # axis so the scratches are re-seeded exactly once per row block.
    @pl.when(f == 0)
    def _seed():
        x1 = x1_ref[...]
        xn2_s[...] = _layernorm(x1, g2_ref[0], b2_ref[0]).astype(jnp.bfloat16)
        acc_s[...] = x1 + bf2_ref[...]          # residual-2 accumulator (incl. bias2)

    h1 = jnp.dot(xn2_s[...], w1_ref[...],
                 preferred_element_type=jnp.float32) + b1_ref[...]   # (tR, tF)
    h1 = _gelu_tanh(h1)
    acc_s[...] += jnp.dot(h1.astype(jnp.bfloat16), w2_ref[...],
                          preferred_element_type=jnp.float32)        # (tR, D)

    @pl.when(f == pl.num_programs(1) - 1)
    def _store():
        o_ref[...] = acc_s[...].astype(o_ref.dtype)


# ----------------------------------------------------------------------------
# Wrapper
# ----------------------------------------------------------------------------
def transformer_encoder_layer(x, params, num_heads):
    B, S, D = x.shape
    F = params['w1'].shape[1]
    H = num_heads
    assert D % H == 0
    dh = D // H
    R = B * S

    cap = _tpu_vmem_capacity_bytes()
    small_vmem = cap < 100 * 1024 * 1024          # v7x: 64 MiB / TC
    vmem_limit = int(min(cap * 3 // 4, 100 * 1024 * 1024))

    # ---- weight repack: bf16 MXU operands, softmax scale folded into Q ----
    scale = 1.0 / math.sqrt(dh)
    q_scale = jnp.concatenate(
        [jnp.full((1, D), scale, jnp.float32),
         jnp.ones((1, 2 * D), jnp.float32)], axis=1)
    wqkv_bf = (params['wqkv'] * q_scale).astype(jnp.bfloat16)   # (D, 3D)
    bqkv = params['bqkv'] * q_scale                             # (1, 3D) f32
    wo_bf = params['wo'].astype(jnp.bfloat16)                   # (D, D)
    w1_bf = params['w1'].astype(jnp.bfloat16)                   # (D, F)
    w2_bf = params['w2'].astype(jnp.bfloat16)                   # (F, D)

    # -------------------- kernel 1: attention sub-layer --------------------
    attn_cost = pl.CostEstimate(
        flops=int(B * (2 * S * D * 3 * D + 4 * S * S * D + 2 * S * D * D)),
        transcendentals=int(B * H * S * S),
        bytes_accessed=int(2 * B * S * D * 4 + 4 * D * D * 2 + 8 * D),
    )
    x1 = pl.pallas_call(
        functools.partial(attention_kernel, num_heads=H),
        out_shape=jax.ShapeDtypeStruct((B, S, D), jnp.float32),
        grid=(B,),
        in_specs=[
            pl.BlockSpec((1, S, D), lambda b: (b, 0, 0)),                  # x
            _const_block_spec((1, D), lambda b: (0, 0)),                   # ln1 gamma
            _const_block_spec((1, D), lambda b: (0, 0)),                   # ln1 beta
            _const_block_spec((D, 3 * D), lambda b: (0, 0)),               # Wqkv
            _const_block_spec((1, 3 * D), lambda b: (0, 0)),               # bqkv
            _const_block_spec((D, D), lambda b: (0, 0)),                   # Wo
            _const_block_spec((1, D), lambda b: (0, 0)),                   # bo
        ],
        out_specs=pl.BlockSpec((1, S, D), lambda b: (b, 0, 0)),
        scratch_shapes=[
            pltpu.VMEM((S, 3 * D), jnp.bfloat16),   # fused qkv (bounds live ranges)
            pltpu.VMEM((S, D), jnp.bfloat16),       # head-concatenated context
        ],
        compiler_params=pltpu.CompilerParams(
            dimension_semantics=("parallel",),
            vmem_limit_bytes=vmem_limit),
        cost_estimate=attn_cost,
    )(x, params['g1'], params['b1'], wqkv_bf, bqkv, wo_bf, params['bo'])

    # -------------------- kernel 2: FFN sub-layer --------------------------
    # Rows from all batch elements are swept together so W1/W2 stream from HBM
    # once per row tile rather than once per batch element.
    f_tile = _pick_tile(F, 256 if small_vmem else 1024, 128)
    r_tile = _pick_tile(R, 512 if small_vmem else 2048, 8)
    NF, NR = F // f_tile, R // r_tile

    x1r = x1.reshape(R, D)
    ffn_cost = pl.CostEstimate(
        flops=int(4 * R * D * F),
        transcendentals=int(R * F),
        bytes_accessed=int(2 * R * D * 4 + NR * 2 * D * F * 2 + 8 * D + 4 * F),
    )
    # TODO(synk): on v5e/v6e with small row counts, W1/W2 tile specs could use
    # pipeline_mode=pl.Buffered(3) to hide the tile-stream DMA latency.
    outr = pl.pallas_call(
        ffn_kernel,
        out_shape=jax.ShapeDtypeStruct((R, D), x.dtype),
        grid=(NR, NF),
        in_specs=[
            pl.BlockSpec((r_tile, D), lambda r, f: (r, 0)),                # x1 rows
            _const_block_spec((1, D), lambda r, f: (0, 0)),                # ln2 gamma
            _const_block_spec((1, D), lambda r, f: (0, 0)),                # ln2 beta
            pl.BlockSpec((D, f_tile), lambda r, f: (0, f)),                # W1 tile
            pl.BlockSpec((1, f_tile), lambda r, f: (0, f)),                # b1 tile
            pl.BlockSpec((f_tile, D), lambda r, f: (f, 0)),                # W2 tile
            _const_block_spec((1, D), lambda r, f: (0, 0)),                # b2
        ],
        out_specs=pl.BlockSpec((r_tile, D), lambda r, f: (r, 0)),
        scratch_shapes=[
            pltpu.VMEM((r_tile, D), jnp.bfloat16),   # LN2(x1) rows, reused over F
            pltpu.VMEM((r_tile, D), jnp.float32),    # residual-2 accumulator
        ],
        compiler_params=pltpu.CompilerParams(
            dimension_semantics=("parallel", "arbitrary"),
            vmem_limit_bytes=vmem_limit),
        cost_estimate=ffn_cost,
    )(x1r, params['g2'], params['b2'], w1_bf, params['bf1'], w2_bf, params['bf2'])

    return outr.reshape(B, S, D)


# ----------------------------------------------------------------------------
# Plain-JAX f32 reference (exact-erf GELU), matching the PyTorch module
# ----------------------------------------------------------------------------
def reference(x, p, num_heads):
    def ln(t, g, b):
        mu = t.mean(-1, keepdims=True)
        var = ((t - mu) ** 2).mean(-1, keepdims=True)
        return (t - mu) / jnp.sqrt(var + 1e-5) * g + b

    B, S, D = x.shape
    dh = D // num_heads
    xn = ln(x, p['g1'][0], p['b1'][0])
    qkv = xn @ p['wqkv'] + p['bqkv'][0]
    q, k, v = jnp.split(qkv, 3, axis=-1)
    q = q.reshape(B, S, num_heads, dh).transpose(0, 2, 1, 3)
    k = k.reshape(B, S, num_heads, dh).transpose(0, 2, 1, 3)
    v = v.reshape(B, S, num_heads, dh).transpose(0, 2, 1, 3)
    s = jnp.einsum('bhqd,bhkd->bhqk', q, k) / math.sqrt(dh)
    pattn = jax.nn.softmax(s, axis=-1)
    ctx = jnp.einsum('bhqk,bhkd->bhqd', pattn, v)
    ctx = ctx.transpose(0, 2, 1, 3).reshape(B, S, D)
    x = x + ctx @ p['wo'] + p['bo'][0]
    xn2 = ln(x, p['g2'][0], p['b2'][0])
    h1 = jax.nn.gelu(xn2 @ p['w1'] + p['bf1'][0], approximate=False)
    return x + h1 @ p['w2'] + p['bf2'][0]


if __name__ == "__main__":
    B, S, D = 2, 8, 32        # batch, seq, d_model
    num_heads = 4
    Fdim = 64                 # dim_feedforward (small test size)

    key = jax.random.PRNGKey(0)
    ks = jax.random.split(key, 8)

    params = {
        'g1':   jnp.ones((1, D), jnp.float32),
        'b1':   jnp.zeros((1, D), jnp.float32),
        'wqkv': 0.02 * jax.random.normal(ks[0], (D, 3 * D), jnp.float32),
        'bqkv': 0.02 * jax.random.normal(ks[1], (1, 3 * D), jnp.float32),
        'wo':   0.02 * jax.random.normal(ks[2], (D, D), jnp.float32),
        'bo':   0.02 * jax.random.normal(ks[3], (1, D), jnp.float32),
        'g2':   jnp.ones((1, D), jnp.float32),
        'b2':   jnp.zeros((1, D), jnp.float32),
        'w1':   0.02 * jax.random.normal(ks[4], (D, Fdim), jnp.float32),
        'bf1':  0.02 * jax.random.normal(ks[5], (1, Fdim), jnp.float32),
        'w2':   0.02 * jax.random.normal(ks[6], (Fdim, D), jnp.float32),
        'bf2':  0.02 * jax.random.normal(ks[7], (1, D), jnp.float32),
    }

    x = jax.random.normal(key, (B, S, D), jnp.float32)

    out = transformer_encoder_layer(x, params, num_heads)
    out = jax.block_until_ready(out)

    ref = reference(x, params, num_heads)
    assert out.shape == (B, S, D) and out.dtype == jnp.float32
    # bf16 matmul operands + bf16 exp + tanh GELU + approx reciprocal
    # -> compare at bf16-level tolerance
    assert jnp.allclose(out, ref, rtol=2e-2, atol=2e-2), \
        f"max abs err {jnp.max(jnp.abs(out - ref))}"

    print("KERNEL_OK")
</pallas_src>

<mosaic_0001>
module attributes {stable_mosaic.version = 11 : i64} {
  func.func @_probe(%arg0: i32, %arg1: memref<8x128xf32, #tpu.memory_space<vmem>>, %arg2: memref<8x128xf32, #tpu.memory_space<vmem>>) attributes {dimension_semantics = [#tpu.dimension_semantics<arbitrary>], iteration_bounds = array<i64: 1>, scalar_prefetch = 0 : i64, scratch_operands = 0 : i64, tpu.core_type = #tpu.core_type<tc>, window_params = [{pipeline_mode = #tpu.pipeline_mode<synchronous>, transform_indices = @transform_0, window_bounds = array<i64: 8, 128>}, {pipeline_mode = #tpu.pipeline_mode<synchronous>, transform_indices = @transform_1, window_bounds = array<i64: 8, 128>}]} {
    %c0 = arith.constant 0 : index
    %c0_0 = arith.constant 0 : index
    %0 = vector.load %arg1[%c0, %c0_0] : memref<8x128xf32, #tpu.memory_space<vmem>>, vector<8x128xf32>
    %cst = arith.constant 2.000000e+00 : f32
    %1 = vector.broadcast %cst : f32 to vector<8x128xf32>
    %2 = arith.mulf %0, %1 : vector<8x128xf32>
    %c0_1 = arith.constant 0 : index
    %c0_2 = arith.constant 0 : index
    %3 = vector.load %arg2[%c0_1, %c0_2] : memref<8x128xf32, #tpu.memory_space<vmem>>, vector<8x128xf32>
    tpu.vector_store %arg2[%c0_1, %c0_2], %2 {strides = array<i32>} : memref<8x128xf32, #tpu.memory_space<vmem>>, vector<8x128xf32>,
    return
  }
  func.func @transform_0(%arg0: i32) -> (i32, i32) {
    %c0_i32 = arith.constant 0 : i32
    %c0_i32_0 = arith.constant 0 : i32
    %c0_i32_1 = arith.constant 0 : i32
    return %c0_i32, %c0_i32_0 : i32, i32
  }
  func.func @transform_1(%arg0: i32) -> (i32, i32) {
    %c0_i32 = arith.constant 0 : i32
    %c0_i32_0 = arith.constant 0 : i32
    %c0_i32_1 = arith.constant 0 : i32
    return %c0_i32, %c0_i32_0 : i32, i32
  }
}

module attributes {stable_mosaic.version = 11 : i64} {
  func.func @attention_kernel(%arg0: i32, %arg1: memref<1x8x32xf32, #tpu.memory_space<vmem>>, %arg2: memref<1x32xf32, #tpu.memory_space<vmem>>, %arg3: memref<1x32xf32, #tpu.memory_space<vmem>>, %arg4: memref<32x96xbf16, #tpu.memory_space<vmem>>, %arg5: memref<1x96xf32, #tpu.memory_space<vmem>>, %arg6: memref<32x32xbf16, #tpu.memory_space<vmem>>, %arg7: memref<1x32xf32, #tpu.memory_space<vmem>>, %arg8: memref<1x8x32xf32, #tpu.memory_space<vmem>>, %arg9: memref<8x96xbf16, #tpu.memory_space<vmem>>, %arg10: memref<8x32xbf16, #tpu.memory_space<vmem>>) attributes {dimension_semantics = [#tpu.dimension_semantics<parallel>], iteration_bounds = array<i64: 2>, scalar_prefetch = 0 : i64, scratch_operands = 2 : i64, tpu.core_type = #tpu.core_type<tc>, window_params = [{transform_indices = @transform_0, window_bounds = array<i64: 1, 8, 32>}, {pipeline_mode = #tpu.pipeline_mode<synchronous>, transform_indices = @transform_1, window_bounds = array<i64: 1, 32>}, {pipeline_mode = #tpu.pipeline_mode<synchronous>, transform_indices = @transform_2, window_bounds = array<i64: 1, 32>}, {pipeline_mode = #tpu.pipeline_mode<synchronous>, transform_indices = @transform_3, window_bounds = array<i64: 32, 96>}, {pipeline_mode = #tpu.pipeline_mode<synchronous>, transform_indices = @transform_4, window_bounds = array<i64: 1, 96>}, {pipeline_mode = #tpu.pipeline_mode<synchronous>, transform_indices = @transform_5, window_bounds = array<i64: 32, 32>}, {pipeline_mode = #tpu.pipeline_mode<synchronous>, transform_indices = @transform_6, window_bounds = array<i64: 1, 32>}, {transform_indices = @transform_7, window_bounds = array<i64: 1, 8, 32>}]} {
    %c0 = arith.constant 0 : index
    %c0_0 = arith.constant 0 : index
    %c0_1 = arith.constant 0 : index
    %0 = vector.load %arg1[%c0, %c0_0, %c0_1] : memref<1x8x32xf32, #tpu.memory_space<vmem>>, vector<1x8x32xf32>
    %1 = vector.shape_cast %0 : vector<1x8x32xf32> to vector<8x32xf32>
    %c0_2 = arith.constant 0 : index
    %c0_3 = arith.constant 0 : index
    %2 = vector.load %arg2[%c0_2, %c0_3] : memref<1x32xf32, #tpu.memory_space<vmem>>, vector<1x32xf32>
    %3 = vector.shape_cast %2 : vector<1x32xf32> to vector<32xf32>
    %c0_4 = arith.constant 0 : index
    %c0_5 = arith.constant 0 : index
    %4 = vector.load %arg3[%c0_4, %c0_5] : memref<1x32xf32, #tpu.memory_space<vmem>>, vector<1x32xf32>
    %5 = vector.shape_cast %4 : vector<1x32xf32> to vector<32xf32>
    %cst = arith.constant dense<0.000000e+00> : vector<8xf32>
    %6 = vector.multi_reduction <add>, %1, %cst [1] : vector<8x32xf32> to vector<8xf32>
    %7 = vector.shape_cast %6 : vector<8xf32> to vector<8x1xf32>
    %cst_6 = arith.constant 3.200000e+01 : f32
    %8 = vector.broadcast %cst_6 : f32 to vector<8x1xf32>
    %9 = arith.divf %7, %8 : vector<8x1xf32>
    %10 = vector.broadcast %9 : vector<8x1xf32> to vector<8x32xf32>
    %11 = arith.subf %1, %10 : vector<8x32xf32>
    %12 = arith.mulf %11, %11 : vector<8x32xf32>
    %cst_7 = arith.constant dense<0.000000e+00> : vector<8xf32>
    %13 = vector.multi_reduction <add>, %12, %cst_7 [1] : vector<8x32xf32> to vector<8xf32>
    %14 = vector.shape_cast %13 : vector<8xf32> to vector<8x1xf32>
    %cst_8 = arith.constant 3.200000e+01 : f32
    %15 = vector.broadcast %cst_8 : f32 to vector<8x1xf32>
    %16 = arith.divf %14, %15 : vector<8x1xf32>
    %cst_9 = arith.constant 9.99999974E-6 : f32
    %17 = vector.broadcast %cst_9 : f32 to vector<8x1xf32>
    %18 = arith.addf %16, %17 : vector<8x1xf32>
    %19 = math.rsqrt %18 : vector<8x1xf32>
    %20 = vector.broadcast %19 : vector<8x1xf32> to vector<8x32xf32>
    %21 = arith.mulf %11, %20 : vector<8x32xf32>
    %22 = vector.shape_cast %3 : vector<32xf32> to vector<1x32xf32>
    %23 = vector.broadcast %22 : vector<1x32xf32> to vector<8x32xf32>
    %24 = arith.mulf %21, %23 : vector<8x32xf32>
    %25 = vector.shape_cast %5 : vector<32xf32> to vector<1x32xf32>
    %26 = vector.broadcast %25 : vector<1x32xf32> to vector<8x32xf32>
    %27 = arith.addf %24, %26 : vector<8x32xf32>
    %28 = arith.truncf %27 : vector<8x32xf32> to vector<8x32xbf16>
    %c0_10 = arith.constant 0 : index
    %c0_11 = arith.constant 0 : index
    %29 = vector.load %arg4[%c0_10, %c0_11] : memref<32x96xbf16, #tpu.memory_space<vmem>>, vector<32x96xbf16>
    %cst_12 = arith.constant dense<0.000000e+00> : vector<8x96xf32>
    %30 = tpu.matmul %28, %29, %cst_12 {dimension_numbers = #tpu.dot_dimension_numbers<[1], [0], [0], [1], [0, 0, 1, 1], [], []>} : vector<8x32xbf16>, vector<32x96xbf16>, vector<8x96xf32> -> vector<8x96xf32>
    %c0_13 = arith.constant 0 : index
    %c0_14 = arith.constant 0 : index
    %31 = vector.load %arg5[%c0_13, %c0_14] : memref<1x96xf32, #tpu.memory_space<vmem>>, vector<1x96xf32>
    %32 = vector.broadcast %31 : vector<1x96xf32> to vector<8x96xf32>
    %33 = arith.addf %30, %32 : vector<8x96xf32>
    %34 = arith.truncf %33 : vector<8x96xf32> to vector<8x96xbf16>
    %c0_15 = arith.constant 0 : index
    %c0_16 = arith.constant 0 : index
    %35 = vector.load %arg9[%c0_15, %c0_16] : memref<8x96xbf16, #tpu.memory_space<vmem>>, vector<8x96xbf16>
    tpu.vector_store %arg9[%c0_15, %c0_16], %34 {strides = array<i32>} : memref<8x96xbf16, #tpu.memory_space<vmem>>, vector<8x96xbf16>,
    %c0_17 = arith.constant 0 : index
    %c0_18 = arith.constant 0 : index
    %36 = vector.load %arg9[%c0_17, %c0_18] : memref<8x96xbf16, #tpu.memory_space<vmem>>, vector<8x8xbf16>
    %c0_19 = arith.constant 0 : index
    %c32 = arith.constant 32 : index
    %37 = vector.load %arg9[%c0_19, %c32] : memref<8x96xbf16, #tpu.memory_space<vmem>>, vector<8x8xbf16>
    %c0_20 = arith.constant 0 : index
    %c64 = arith.constant 64 : index
    %38 = vector.load %arg9[%c0_20, %c64] : memref<8x96xbf16, #tpu.memory_space<vmem>>, vector<8x8xbf16>
    %cst_21 = arith.constant dense<0.000000e+00> : vector<8x8xf32>
    %39 = tpu.matmul %36, %37, %cst_21 {dimension_numbers = #tpu.dot_dimension_numbers<[1], [1], [0], [0], [0, 0, 1, 0], [], []>} : vector<8x8xbf16>, vector<8x8xbf16>, vector<8x8xf32> -> vector<8x8xf32>
    %cst_22 = arith.constant dense<0xFF800000> : vector<8xf32>
    %40 = vector.multi_reduction <maximumf>, %39, %cst_22 [1] : vector<8x8xf32> to vector<8xf32>
    %41 = vector.shape_cast %40 : vector<8xf32> to vector<8x1xf32>
    %42 = vector.broadcast %41 : vector<8x1xf32> to vector<8x8xf32>
    %43 = arith.subf %39, %42 : vector<8x8xf32>
    %44 = arith.truncf %43 : vector<8x8xf32> to vector<8x8xbf16>
    %45 = math.exp %44 : vector<8x8xbf16>
    %46 = arith.extf %45 : vector<8x8xbf16> to vector<8x8xf32>
    %cst_23 = arith.constant dense<0.000000e+00> : vector<8xf32>
    %47 = vector.multi_reduction <add>, %46, %cst_23 [1] : vector<8x8xf32> to vector<8xf32>
    %48 = vector.shape_cast %47 : vector<8xf32> to vector<8x1xf32>
    %49 = tpu.reciprocal %48 {approx = true} : vector<8x1xf32> -> vector<8x1xf32>
    %50 = arith.truncf %49 : vector<8x1xf32> to vector<8x1xbf16>
    %51 = vector.broadcast %50 : vector<8x1xbf16> to vector<8x8xbf16>
    %52 = arith.mulf %45, %51 : vector<8x8xbf16>
    %cst_24 = arith.constant dense<0.000000e+00> : vector<8x8xf32>
    %53 = tpu.matmul %52, %38, %cst_24 {dimension_numbers = #tpu.dot_dimension_numbers<[1], [0], [0], [1], [0, 0, 1, 1], [], []>} : vector<8x8xbf16>, vector<8x8xbf16>, vector<8x8xf32> -> vector<8x8xf32>
    %54 = arith.truncf %53 : vector<8x8xf32> to vector<8x8xbf16>
    %c0_25 = arith.constant 0 : index
    %c0_26 = arith.constant 0 : index
    %55 = vector.load %arg10[%c0_25, %c0_26] : memref<8x32xbf16, #tpu.memory_space<vmem>>, vector<8x8xbf16>
    tpu.vector_store %arg10[%c0_25, %c0_26], %54 {strides = array<i32>} : memref<8x32xbf16, #tpu.memory_space<vmem>>, vector<8x8xbf16>,
    %c0_27 = arith.constant 0 : index
    %c8 = arith.constant 8 : index
    %56 = vector.load %arg9[%c0_27, %c8] : memref<8x96xbf16, #tpu.memory_space<vmem>>, vector<8x8xbf16>
    %c0_28 = arith.constant 0 : index
    %c40 = arith.constant 40 : index
    %57 = vector.load %arg9[%c0_28, %c40] : memref<8x96xbf16, #tpu.memory_space<vmem>>, vector<8x8xbf16>
    %c0_29 = arith.constant 0 : index
    %c72 = arith.constant 72 : index
    %58 = vector.load %arg9[%c0_29, %c72] : memref<8x96xbf16, #tpu.memory_space<vmem>>, vector<8x8xbf16>
    %cst_30 = arith.constant dense<0.000000e+00> : vector<8x8xf32>
    %59 = tpu.matmul %56, %57, %cst_30 {dimension_numbers = #tpu.dot_dimension_numbers<[1], [1], [0], [0], [0, 0, 1, 0], [], []>} : vector<8x8xbf16>, vector<8x8xbf16>, vector<8x8xf32> -> vector<8x8xf32>
    %cst_31 = arith.constant dense<0xFF800000> : vector<8xf32>
    %60 = vector.multi_reduction <maximumf>, %59, %cst_31 [1] : vector<8x8xf32> to vector<8xf32>
    %61 = vector.shape_cast %60 : vector<8xf32> to vector<8x1xf32>
    %62 = vector.broadcast %61 : vector<8x1xf32> to vector<8x8xf32>
    %63 = arith.subf %59, %62 : vector<8x8xf32>
    %64 = arith.truncf %63 : vector<8x8xf32> to vector<8x8xbf16>
    %65 = math.exp %64 : vector<8x8xbf16>
    %66 = arith.extf %65 : vector<8x8xbf16> to vector<8x8xf32>
    %cst_32 = arith.constant dense<0.000000e+00> : vector<8xf32>
    %67 = vector.multi_reduction <add>, %66, %cst_32 [1] : vector<8x8xf32> to vector<8xf32>
    %68 = vector.shape_cast %67 : vector<8xf32> to vector<8x1xf32>
    %69 = tpu.reciprocal %68 {approx = true} : vector<8x1xf32> -> vector<8x1xf32>
    %70 = arith.truncf %69 : vector<8x1xf32> to vector<8x1xbf16>
    %71 = vector.broadcast %70 : vector<8x1xbf16> to vector<8x8xbf16>
    %72 = arith.mulf %65, %71 : vector<8x8xbf16>
    %cst_33 = arith.constant dense<0.000000e+00> : vector<8x8xf32>
    %73 = tpu.matmul %72, %58, %cst_33 {dimension_numbers = #tpu.dot_dimension_numbers<[1], [0], [0], [1], [0, 0, 1, 1], [], []>} : vector<8x8xbf16>, vector<8x8xbf16>, vector<8x8xf32> -> vector<8x8xf32>
    %74 = arith.truncf %73 : vector<8x8xf32> to vector<8x8xbf16>
    %c0_34 = arith.constant 0 : index
    %c8_35 = arith.constant 8 : index
    %75 = vector.load %arg10[%c0_34, %c8_35] : memref<8x32xbf16, #tpu.memory_space<vmem>>, vector<8x8xbf16>
    tpu.vector_store %arg10[%c0_34, %c8_35], %74 {strides = array<i32>} : memref<8x32xbf16, #tpu.memory_space<vmem>>, vector<8x8xbf16>,
    %c0_36 = arith.constant 0 : index
    %c16 = arith.constant 16 : index
    %76 = vector.load %arg9[%c0_36, %c16] : memref<8x96xbf16, #tpu.memory_space<vmem>>, vector<8x8xbf16>
    %c0_37 = arith.constant 0 : index
    %c48 = arith.constant 48 : index
    %77 = vector.load %arg9[%c0_37, %c48] : memref<8x96xbf16, #tpu.memory_space<vmem>>, vector<8x8xbf16>
    %c0_38 = arith.constant 0 : index
    %c80 = arith.constant 80 : index
    %78 = vector.load %arg9[%c0_38, %c80] : memref<8x96xbf16, #tpu.memory_space<vmem>>, vector<8x8xbf16>
    %cst_39 = arith.constant dense<0.000000e+00> : vector<8x8xf32>
    %79 = tpu.matmul %76, %77, %cst_39 {dimension_numbers = #tpu.dot_dimension_numbers<[1], [1], [0], [0], [0, 0, 1, 0], [], []>} : vector<8x8xbf16>, vector<8x8xbf16>, vector<8x8xf32> -> vector<8x8xf32>
    %cst_40 = arith.constant dense<0xFF800000> : vector<8xf32>
    %80 = vector.multi_reduction <maximumf>, %79, %cst_40 [1] : vector<8x8xf32> to vector<8xf32>
    %81 = vector.shape_cast %80 : vector<8xf32> to vector<8x1xf32>
    %82 = vector.broadcast %81 : vector<8x1xf32> to vector<8x8xf32>
    %83 = arith.subf %79, %82 : vector<8x8xf32>
    %84 = arith.truncf %83 : vector<8x8xf32> to vector<8x8xbf16>
    %85 = math.exp %84 : vector<8x8xbf16>
    %86 = arith.extf %85 : vector<8x8xbf16> to vector<8x8xf32>
    %cst_41 = arith.constant dense<0.000000e+00> : vector<8xf32>
    %87 = vector.multi_reduction <add>, %86, %cst_41 [1] : vector<8x8xf32> to vector<8xf32>
    %88 = vector.shape_cast %87 : vector<8xf32> to vector<8x1xf32>
    %89 = tpu.reciprocal %88 {approx = true} : vector<8x1xf32> -> vector<8x1xf32>
    %90 = arith.truncf %89 : vector<8x1xf32> to vector<8x1xbf16>
    %91 = vector.broadcast %90 : vector<8x1xbf16> to vector<8x8xbf16>
    %92 = arith.mulf %85, %91 : vector<8x8xbf16>
    %cst_42 = arith.constant dense<0.000000e+00> : vector<8x8xf32>
    %93 = tpu.matmul %92, %78, %cst_42 {dimension_numbers = #tpu.dot_dimension_numbers<[1], [0], [0], [1], [0, 0, 1, 1], [], []>} : vector<8x8xbf16>, vector<8x8xbf16>, vector<8x8xf32> -> vector<8x8xf32>
    %94 = arith.truncf %93 : vector<8x8xf32> to vector<8x8xbf16>
    %c0_43 = arith.constant 0 : index
    %c16_44 = arith.constant 16 : index
    %95 = vector.load %arg10[%c0_43, %c16_44] : memref<8x32xbf16, #tpu.memory_space<vmem>>, vector<8x8xbf16>
    tpu.vector_store %arg10[%c0_43, %c16_44], %94 {strides = array<i32>} : memref<8x32xbf16, #tpu.memory_space<vmem>>, vector<8x8xbf16>,
    %c0_45 = arith.constant 0 : index
    %c24 = arith.constant 24 : index
    %96 = vector.load %arg9[%c0_45, %c24] : memref<8x96xbf16, #tpu.memory_space<vmem>>, vector<8x8xbf16>
    %c0_46 = arith.constant 0 : index
    %c56 = arith.constant 56 : index
    %97 = vector.load %arg9[%c0_46, %c56] : memref<8x96xbf16, #tpu.memory_space<vmem>>, vector<8x8xbf16>
    %c0_47 = arith.constant 0 : index
    %c88 = arith.constant 88 : index
    %98 = vector.load %arg9[%c0_47, %c88] : memref<8x96xbf16, #tpu.memory_space<vmem>>, vector<8x8xbf16>
    %cst_48 = arith.constant dense<0.000000e+00> : vector<8x8xf32>
    %99 = tpu.matmul %96, %97, %cst_48 {dimension_numbers = #tpu.dot_dimension_numbers<[1], [1], [0], [0], [0, 0, 1, 0], [], []>} : vector<8x8xbf16>, vector<8x8xbf16>, vector<8x8xf32> -> vector<8x8xf32>
    %cst_49 = arith.constant dense<0xFF800000> : vector<8xf32>
    %100 = vector.multi_reduction <maximumf>, %99, %cst_49 [1] : vector<8x8xf32> to vector<8xf32>
    %101 = vector.shape_cast %100 : vector<8xf32> to vector<8x1xf32>
    %102 = vector.broadcast %101 : vector<8x1xf32> to vector<8x8xf32>
    %103 = arith.subf %99, %102 : vector<8x8xf32>
    %104 = arith.truncf %103 : vector<8x8xf32> to vector<8x8xbf16>
    %105 = math.exp %104 : vector<8x8xbf16>
    %106 = arith.extf %105 : vector<8x8xbf16> to vector<8x8xf32>
    %cst_50 = arith.constant dense<0.000000e+00> : vector<8xf32>
    %107 = vector.multi_reduction <add>, %106, %cst_50 [1] : vector<8x8xf32> to vector<8xf32>
    %108 = vector.shape_cast %107 : vector<8xf32> to vector<8x1xf32>
    %109 = tpu.reciprocal %108 {approx = true} : vector<8x1xf32> -> vector<8x1xf32>
    %110 = arith.truncf %109 : vector<8x1xf32> to vector<8x1xbf16>
    %111 = vector.broadcast %110 : vector<8x1xbf16> to vector<8x8xbf16>
    %112 = arith.mulf %105, %111 : vector<8x8xbf16>
    %cst_51 = arith.constant dense<0.000000e+00> : vector<8x8xf32>
    %113 = tpu.matmul %112, %98, %cst_51 {dimension_numbers = #tpu.dot_dimension_numbers<[1], [0], [0], [1], [0, 0, 1, 1], [], []>} : vector<8x8xbf16>, vector<8x8xbf16>, vector<8x8xf32> -> vector<8x8xf32>
    %114 = arith.truncf %113 : vector<8x8xf32> to vector<8x8xbf16>
    %c0_52 = arith.constant 0 : index
    %c24_53 = arith.constant 24 : index
    %115 = vector.load %arg10[%c0_52, %c24_53] : memref<8x32xbf16, #tpu.memory_space<vmem>>, vector<8x8xbf16>
    tpu.vector_store %arg10[%c0_52, %c24_53], %114 {strides = array<i32>} : memref<8x32xbf16, #tpu.memory_space<vmem>>, vector<8x8xbf16>,
    %c0_54 = arith.constant 0 : index
    %c0_55 = arith.constant 0 : index
    %116 = vector.load %arg10[%c0_54, %c0_55] : memref<8x32xbf16, #tpu.memory_space<vmem>>, vector<8x32xbf16>
    %c0_56 = arith.constant 0 : index
    %c0_57 = arith.constant 0 : index
    %117 = vector.load %arg6[%c0_56, %c0_57] : memref<32x32xbf16, #tpu.memory_space<vmem>>, vector<32x32xbf16>
    %cst_58 = arith.constant dense<0.000000e+00> : vector<8x32xf32>
    %118 = tpu.matmul %116, %117, %cst_58 {dimension_numbers = #tpu.dot_dimension_numbers<[1], [0], [0], [1], [0, 0, 1, 1], [], []>} : vector<8x32xbf16>, vector<32x32xbf16>, vector<8x32xf32> -> vector<8x32xf32>
    %119 = arith.addf %1, %118 : vector<8x32xf32>
    %c0_59 = arith.constant 0 : index
    %c0_60 = arith.constant 0 : index
    %120 = vector.load %arg7[%c0_59, %c0_60] : memref<1x32xf32, #tpu.memory_space<vmem>>, vector<1x32xf32>
    %121 = vector.broadcast %120 : vector<1x32xf32> to vector<8x32xf32>
    %122 = arith.addf %119, %121 : vector<8x32xf32>
    %c0_61 = arith.constant 0 : index
    %c0_62 = arith.constant 0 : index
    %c0_63 = arith.constant 0 : index
    %123 = vector.load %arg8[%c0_61, %c0_62, %c0_63] : memref<1x8x32xf32, #tpu.memory_space<vmem>>, vector<1x8x32xf32>
    %124 = vector.shape_cast %123 : vector<1x8x32xf32> to vector<8x32xf32>
    %125 = vector.shape_cast %122 : vector<8x32xf32> to vector<1x8x32xf32>
    tpu.vector_store %arg8[%c0_61, %c0_62, %c0_63], %125 {strides = array<i32>} : memref<1x8x32xf32, #tpu.memory_space<vmem>>, vector<1x8x32xf32>,
    return
  }
  func.func @transform_0(%arg0: i32) -> (i32, i32, i32) {
    %c0_i32 = arith.constant 0 : i32
    %c0_i32_0 = arith.constant 0 : i32
    %c0_i32_1 = arith.constant 0 : i32
    return %arg0, %c0_i32, %c0_i32_0 : i32, i32, i32
  }
  func.func @transform_1(%arg0: i32) -> (i32, i32) {
    %c0_i32 = arith.constant 0 : i32
    %c0_i32_0 = arith.constant 0 : i32
    %c0_i32_1 = arith.constant 0 : i32
    return %c0_i32, %c0_i32_0 : i32, i32
  }
  func.func @transform_2(%arg0: i32) -> (i32, i32) {
    %c0_i32 = arith.constant 0 : i32
    %c0_i32_0 = arith.constant 0 : i32
    %c0_i32_1 = arith.constant 0 : i32
    return %c0_i32, %c0_i32_0 : i32, i32
  }
  func.func @transform_3(%arg0: i32) -> (i32, i32) {
    %c0_i32 = arith.constant 0 : i32
    %c0_i32_0 = arith.constant 0 : i32
    %c0_i32_1 = arith.constant 0 : i32
    return %c0_i32, %c0_i32_0 : i32, i32
  }
  func.func @transform_4(%arg0: i32) -> (i32, i32) {
    %c0_i32 = arith.constant 0 : i32
    %c0_i32_0 = arith.constant 0 : i32
    %c0_i32_1 = arith.constant 0 : i32
    return %c0_i32, %c0_i32_0 : i32, i32
  }
  func.func @transform_5(%arg0: i32) -> (i32, i32) {
    %c0_i32 = arith.constant 0 : i32
    %c0_i32_0 = arith.constant 0 : i32
    %c0_i32_1 = arith.constant 0 : i32
    return %c0_i32, %c0_i32_0 : i32, i32
  }
  func.func @transform_6(%arg0: i32) -> (i32, i32) {
    %c0_i32 = arith.constant 0 : i32
    %c0_i32_0 = arith.constant 0 : i32
    %c0_i32_1 = arith.constant 0 : i32
    return %c0_i32, %c0_i32_0 : i32, i32
  }
  func.func @transform_7(%arg0: i32) -> (i32, i32, i32) {
    %c0_i32 = arith.constant 0 : i32
    %c0_i32_0 = arith.constant 0 : i32
    %c0_i32_1 = arith.constant 0 : i32
    return %arg0, %c0_i32, %c0_i32_0 : i32, i32, i32
  }
}

</mosaic_0001>

<llo_original>
// kernel: tpu_custom_call.1
$region0: #{tpu_custom_call.1}
  #allocation0 [shape = 'u32[]', space=smem, size = 0x4, offset = 0x4, fixed_abs, tag = 'smem constant byte address 0x4 - core index']
  #allocation1 [shape = 'u32[144,128]{1,0:T(1,128)}', space=vmem, size = 0x12000, scoped, tag = 'internal scratch']
  %s0 = inlined_call_operand.hbm [shape: f32[8,128], index: 0, kind: input, shape index: {}]
  %s1 = inlined_call_operand.hbm [shape: f32[8,128], index: 1, kind: output, shape index: {}]
  %s2 = sld [smem:[#allocation0]]
  $region18: #{tpu_custom_call.1} parent=0
    _
  %s4 = ssub.s32 1, %s2
  %s5 = scalar_select 0, %s4, %s2
  $region1: #{tpu_custom_call.1} parent=0
    #allocation2 [shape = 'u8[4096]{0}', space=vmem, size = 0x1000, scoped, tag = 'input window, operand 0, single buffered']
    #allocation3 [shape = 's32[1]{0}', space=sflag, size = 0x4, scoped, tag = 'scoped memory for tpu_custom_call.1']
    #allocation4 [shape = 's32[1]{0}', space=sflag, size = 0x4, scoped, tag = 'scoped memory for tpu_custom_call.1']
    #allocation5 [shape = 'u8[4096]{0}', space=vmem, size = 0x1000, scoped, tag = 'output window, operand 0, single buffered']
    %6 = vsyncpa [#allocation3], 0
    %7 = vsyncpa [#allocation4], 0
    // Predicated region
    $region2: #{tpu_custom_call.1} parent=1 // pred_check
      _
    $region3: #{tpu_custom_call.1} parent=1 // pred_check_branch
      %9 = sbr.rel (0) target = $region5
    $region4: #{tpu_custom_call.1} parent=1 // pred_region
      %s11 = ssub.s32 128, 128
      %12 = vsyncadd [#allocation3], %s11
      %s14 = sshll.u32 [#allocation2], 4
      %s15 = int_to_ptr.vmem [resolvable:$true] %s14
      %17 = dma.hbm_to_vmem [thread:$0]  %s0, 128, %s15, [#allocation3]
    $region5: #{tpu_custom_call.1} parent=1 // pred_fallthru
      _
    // Predicated region
    $region6: #{tpu_custom_call.1} parent=1 // pred_check
      _
    $region7: #{tpu_custom_call.1} parent=1 // pred_check_branch
      %19 = sbr.rel (0) target = $region9
    $region8: #{tpu_custom_call.1} parent=1 // pred_region
      %20 = dma.done [#allocation3], 128
    $region9: #{tpu_custom_call.1} parent=1 // pred_fallthru
      _
    %v21 = vld [vmem:[#allocation2] sm:$0xff]
    %v22 = vmul.f32 %v21, 2.0
    %23 = vst [vmem:[#allocation5] sm:$0xff] %v22
    // Predicated region
    $region10: #{tpu_custom_call.1} parent=1 // pred_check
      _
    $region11: #{tpu_custom_call.1} parent=1 // pred_check_branch
      %25 = sbr.rel (0) target = $region13
    $region12: #{tpu_custom_call.1} parent=1 // pred_region
      %s27 = ssub.s32 128, 128
      %28 = vsyncadd [#allocation4], %s27
      %s30 = sshll.u32 [#allocation5], 4
      %s31 = int_to_ptr.vmem [resolvable:$true] %s30
      %33 = dma.vmem_to_hbm [thread:$0]  %s31, 128, %s1, [#allocation4]
    $region13: #{tpu_custom_call.1} parent=1 // pred_fallthru
      _
    // Predicated region
    $region14: #{tpu_custom_call.1} parent=1 // pred_check
      _
    $region15: #{tpu_custom_call.1} parent=1 // pred_check_branch
      %35 = sbr.rel (0) target = $region17
    $region16: #{tpu_custom_call.1} parent=1 // pred_region
      %36 = dma.done [#allocation4], 128
    $region17: #{tpu_custom_call.1} parent=1 // pred_fallthru
      _
    %37 = vsyncpa [#allocation3], 1
    %38 = vsyncpa [#allocation4], 1

// kernel: tpu_custom_call.1
$region0: #{tpu_custom_call.1}
  #allocation0 [shape = 'u32[]', space=smem, size = 0x4, offset = 0x4, fixed_abs, tag = 'smem constant byte address 0x4 - core index']
  #allocation1 [shape = 'u32[144,128]{1,0:T(1,128)}', space=vmem, size = 0x12000, scoped, tag = 'internal scratch']
  #allocation2 [shape = 'bf16[8,96]{1,0:T(8,128)(2,1)}', space=vmem, size = 0x800, scoped, tag = 'scratch operand']
  #allocation3 [shape = 'bf16[8,32]{1,0:T(8,128)(2,1)}', space=vmem, size = 0x800, scoped, tag = 'scratch operand']
  %s0 = inlined_call_operand.hbm [shape: f32[2,8,32], index: 0, kind: input, shape index: {}]
  %s1 = inlined_call_operand.hbm [shape: f32[1,32], index: 1, kind: input, shape index: {}]
  %s2 = inlined_call_operand.hbm [shape: f32[1,32], index: 2, kind: input, shape index: {}]
  %s3 = inlined_call_operand.hbm [shape: bf16[32,96], index: 3, kind: input, shape index: {}]
  %s4 = inlined_call_operand.hbm [shape: f32[1,96], index: 4, kind: input, shape index: {}]
  %s5 = inlined_call_operand.hbm [shape: bf16[32,32], index: 5, kind: input, shape index: {}]
  %s6 = inlined_call_operand.hbm [shape: f32[1,32], index: 6, kind: input, shape index: {}]
  %s7 = inlined_call_operand.hbm [shape: f32[2,8,32], index: 7, kind: output, shape index: {}]
  %s8 = sld [smem:[#allocation0]]
  $region89: #{tpu_custom_call.1} parent=0
    _
  %s10 = ssub.s32 1, %s8
  %s11 = scalar_select 0, %s10, %s8
  $region1: #{tpu_custom_call.1} parent=0
    #allocation4 [shape = 'u8[8192]{0}', space=vmem, size = 0x2000, scoped, tag = 'input window, operand 0']
    #allocation5 [shape = 's32[2]{0}', space=sflag, size = 0x8, scoped, tag = 'scoped memory for tpu_custom_call.1']
    #allocation6 [shape = 's32[2]{0}', space=sflag, size = 0x8, scoped, tag = 'scoped memory for tpu_custom_call.1']
    #allocation7 [shape = 'u8[512]{0}', space=vmem, size = 0x400, scoped, tag = 'input window, operand 1, single buffered']
    #allocation8 [shape = 's32[1]{0}', space=sflag, size = 0x4, scoped, tag = 'scoped memory for tpu_custom_call.1']
    #allocation9 [shape = 'u8[512]{0}', space=vmem, size = 0x400, scoped, tag = 'input window, operand 2, single buffered']
    #allocation10 [shape = 'u8[8192]{0}', space=vmem, size = 0x2000, scoped, tag = 'input window, operand 3, single buffered']
    #allocation11 [shape = 's32[1]{0}', space=sflag, size = 0x4, scoped, tag = 'scoped memory for tpu_custom_call.1']
    #allocation12 [shape = 'u8[512]{0}', space=vmem, size = 0x400, scoped, tag = 'input window, operand 4, single buffered']
    #allocation13 [shape = 'u8[8192]{0}', space=vmem, size = 0x2000, scoped, tag = 'input window, operand 5, single buffered']
    #allocation14 [shape = 's32[1]{0}', space=sflag, size = 0x4, scoped, tag = 'scoped memory for tpu_custom_call.1']
    #allocation15 [shape = 'u8[512]{0}', space=vmem, size = 0x400, scoped, tag = 'input window, operand 6, single buffered']
    #allocation16 [shape = 'u8[8192]{0}', space=vmem, size = 0x2000, scoped, tag = 'output window, operand 0']
    %12 = vsyncpa [#allocation5], 0
    %s13 = scalar_lea.sflag [#allocation5], 1
    %14 = vsyncpa %s13, 0
    %15 = vsyncpa [#allocation8], 0
    %16 = vsyncpa [#allocation11], 0
    %17 = vsyncpa [#allocation14], 0
    %18 = vsyncpa [#allocation6], 0
    %s19 = scalar_lea.sflag [#allocation6], 1
    %20 = vsyncpa %s19, 0
    loop: start=0, step=1, limit=4
    $region2: #{tpu_custom_call.1} parent=1 // loop_pre_header
      _
    $region3: #{tpu_custom_call.1} parent=1 // loop_header
      %s22 = sphi 0, %s26
      %p23 = scmp.ge.s32.totalorder %s22, 4
      %s32 = sphi 0, %s34
      %s35 = sphi 0, %s32
      %s36 = sphi 0, %s35
      %s52 = sphi 0, %s36
      %s56 = sphi 0, %s56
      %s58 = sphi 0, %s56
      %s59 = sphi 0, %s58
      %s73 = sphi 0, %s59
      %s77 = sphi 0, %s77
      %s79 = sphi 0, %s77
      %s80 = sphi 0, %s79
      %s94 = sphi 0, %s80
      %s98 = sphi 0, %s98
      %s100 = sphi 0, %s98
      %s101 = sphi 0, %s100
      %s115 = sphi 0, %s101
      %s119 = sphi 0, %s119
      %s121 = sphi 0, %s119
      %s122 = sphi 0, %s121
      %s136 = sphi 0, %s122
      %s140 = sphi 0, %s140
      %s142 = sphi 0, %s140
      %s143 = sphi 0, %s142
      %s157 = sphi 0, %s143
      %s161 = sphi 0, %s161
      %s163 = sphi 0, %s161
      %s164 = sphi 0, %s163
      %s178 = sphi 0, %s164
      %s184 = sphi 0, %s186
      %s187 = sphi 0, %s184
      %s188 = sphi 0, %s187
      %s204 = sphi 0, %s188
    $region4: #{tpu_custom_call.1} parent=1 // loop_header_branch
      %25 = sbr.rel (%p23) target = $region8
    $region5: #{tpu_custom_call.1} parent=1 // loop_body
      %s27 = ssub.s32 %s22, 1
      %s28 = ssub.s32 %s22, 2
      %s29 = sadd.s32 %s22, 1
      %s30 = ssub.s32 %s22, %s29
      %p31 = scmp.eq.s32.totalorder %s30, 0
      %s33 = sadd.s32 %s32, 1
      %s34 = scalar_select %p31, %s32, %s33
      %p37 = pneg %p31
      %p38 = scmp.eq.s32.totalorder %s22, 1
      %p39 = por %p37, %p38
      %p40 = scmp.ne.s32.totalorder %s32, %s35
      %p41 = scmp.eq.s32.totalorder %s22, 0
      %p42 = por %p40, %p41
      %p43 = scmp.ne.s32.totalorder %s32, %s35
      %p44 = scmp.eq.s32.totalorder %s27, 1
      %p45 = por %p43, %p44
      %p46 = scmp.ne.s32.totalorder %s35, %s36
      %p47 = scmp.eq.s32.totalorder %s27, 0
      %p48 = por %p46, %p47
      %p49 = scmp.ne.s32.totalorder %s35, %s36
      %p50 = scmp.eq.s32.totalorder %s28, 1
      %p51 = por %p49, %p50
      %p53 = scmp.ne.s32.totalorder %s36, %s52
      %p54 = scmp.eq.s32.totalorder %s28, 0
      %p55 = por %p53, %p54
      %s57 = sadd.s32 %s56, 1
      %p60 = scmp.eq.s32.totalorder %s22, 1
      %p61 = scmp.ne.s32.totalorder %s56, %s58
      %p62 = scmp.eq.s32.totalorder %s22, 0
      %p63 = por %p61, %p62
      %p64 = scmp.ne.s32.totalorder %s56, %s58
      %p65 = scmp.eq.s32.totalorder %s27, 1
      %p66 = por %p64, %p65
      %p67 = scmp.ne.s32.totalorder %s58, %s59
      %p68 = scmp.eq.s32.totalorder %s27, 0
      %p69 = por %p67, %p68
      %p70 = scmp.ne.s32.totalorder %s58, %s59
      %p71 = scmp.eq.s32.totalorder %s28, 1
      %p72 = por %p70, %p71
      %p74 = scmp.ne.s32.totalorder %s59, %s73
      %p75 = scmp.eq.s32.totalorder %s28, 0
      %p76 = por %p74, %p75
      %s78 = sadd.s32 %s77, 1
      %p81 = scmp.eq.s32.totalorder %s22, 1
      %p82 = scmp.ne.s32.totalorder %s77, %s79
      %p83 = scmp.eq.s32.totalorder %s22, 0
      %p84 = por %p82, %p83
      %p85 = scmp.ne.s32.totalorder %s77, %s79
      %p86 = scmp.eq.s32.totalorder %s27, 1
      %p87 = por %p85, %p86
      %p88 = scmp.ne.s32.totalorder %s79, %s80
      %p89 = scmp.eq.s32.totalorder %s27, 0
      %p90 = por %p88, %p89
      %p91 = scmp.ne.s32.totalorder %s79, %s80
      %p92 = scmp.eq.s32.totalorder %s28, 1
      %p93 = por %p91, %p92
      %p95 = scmp.ne.s32.totalorder %s80, %s94
      %p96 = scmp.eq.s32.totalorder %s28, 0
      %p97 = por %p95, %p96
      %s99 = sadd.s32 %s98, 1
      %p102 = scmp.eq.s32.totalorder %s22, 1
      %p103 = scmp.ne.s32.totalorder %s98, %s100
      %p104 = scmp.eq.s32.totalorder %s22, 0
      %p105 = por %p103, %p104
      %p106 = scmp.ne.s32.totalorder %s98, %s100
      %p107 = scmp.eq.s32.totalorder %s27, 1
      %p108 = por %p106, %p107
      %p109 = scmp.ne.s32.totalorder %s100, %s101
      %p110 = scmp.eq.s32.totalorder %s27, 0
      %p111 = por %p109, %p110
      %p112 = scmp.ne.s32.totalorder %s100, %s101
      %p113 = scmp.eq.s32.totalorder %s28, 1
      %p114 = por %p112, %p113
      %p116 = scmp.ne.s32.totalorder %s101, %s115
      %p117 = scmp.eq.s32.totalorder %s28, 0
      %p118 = por %p116, %p117
      %s120 = sadd.s32 %s119, 1
      %p123 = scmp.eq.s32.totalorder %s22, 1
      %p124 = scmp.ne.s32.totalorder %s119, %s121
      %p125 = scmp.eq.s32.totalorder %s22, 0
      %p126 = por %p124, %p125
      %p127 = scmp.ne.s32.totalorder %s119, %s121
      %p128 = scmp.eq.s32.totalorder %s27, 1
      %p129 = por %p127, %p128
      %p130 = scmp.ne.s32.totalorder %s121, %s122
      %p131 = scmp.eq.s32.totalorder %s27, 0
      %p132 = por %p130, %p131
      %p133 = scmp.ne.s32.totalorder %s121, %s122
      %p134 = scmp.eq.s32.totalorder %s28, 1
      %p135 = por %p133, %p134
      %p137 = scmp.ne.s32.totalorder %s122, %s136
      %p138 = scmp.eq.s32.totalorder %s28, 0
      %p139 = por %p137, %p138
      %s141 = sadd.s32 %s140, 1
      %p144 = scmp.eq.s32.totalorder %s22, 1
      %p145 = scmp.ne.s32.totalorder %s140, %s142
      %p146 = scmp.eq.s32.totalorder %s22, 0
      %p147 = por %p145, %p146
      %p148 = scmp.ne.s32.totalorder %s140, %s142
      %p149 = scmp.eq.s32.totalorder %s27, 1
      %p150 = por %p148, %p149
      %p151 = scmp.ne.s32.totalorder %s142, %s143
      %p152 = scmp.eq.s32.totalorder %s27, 0
      %p153 = por %p151, %p152
      %p154 = scmp.ne.s32.totalorder %s142, %s143
      %p155 = scmp.eq.s32.totalorder %s28, 1
      %p156 = por %p154, %p155
      %p158 = scmp.ne.s32.totalorder %s143, %s157
      %p159 = scmp.eq.s32.totalorder %s28, 0
      %p160 = por %p158, %p159
      %s162 = sadd.s32 %s161, 1
      %p165 = scmp.eq.s32.totalorder %s22, 1
      %p166 = scmp.ne.s32.totalorder %s161, %s163
      %p167 = scmp.eq.s32.totalorder %s22, 0
      %p168 = por %p166, %p167
      %p169 = scmp.ne.s32.totalorder %s161, %s163
      %p170 = scmp.eq.s32.totalorder %s27, 1
      %p171 = por %p169, %p170
      %p172 = scmp.ne.s32.totalorder %s163, %s164
      %p173 = scmp.eq.s32.totalorder %s27, 0
      %p174 = por %p172, %p173
      %p175 = scmp.ne.s32.totalorder %s163, %s164
      %p176 = scmp.eq.s32.totalorder %s28, 1
      %p177 = por %p175, %p176
      %p179 = scmp.ne.s32.totalorder %s164, %s178
      %p180 = scmp.eq.s32.totalorder %s28, 0
      %p181 = por %p179, %p180
      %s182 = ssub.s32 %s22, %s29
      %p183 = scmp.eq.s32.totalorder %s182, 0
      %s185 = sadd.s32 %s184, 1
      %s186 = scalar_select %p183, %s184, %s185
      %p189 = pneg %p183
      %p190 = scmp.eq.s32.totalorder %s22, 1
      %p191 = por %p189, %p190
      %p192 = scmp.ne.s32.totalorder %s184, %s187
      %p193 = scmp.eq.s32.totalorder %s22, 0
      %p194 = por %p192, %p193
      %p195 = scmp.ne.s32.totalorder %s184, %s187
      %p196 = scmp.eq.s32.totalorder %s27, 1
      %p197 = por %p195, %p196
      %p198 = scmp.ne.s32.totalorder %s187, %s188
      %p199 = scmp.eq.s32.totalorder %s27, 0
      %p200 = por %p198, %p199
      %p201 = scmp.ne.s32.totalorder %s187, %s188
      %p202 = scmp.eq.s32.totalorder %s28, 1
      %p203 = por %p201, %p202
      %p205 = scmp.ne.s32.totalorder %s188, %s204
      %p206 = scmp.eq.s32.totalorder %s28, 0
      %p207 = por %p205, %p206
      %p208 = scmp.le.s32.totalorder 1, %s22
      %p209 = scmp.lt.s32.totalorder %s22, 3
      %p210 = pnand %p208, %p209
      %p211 = pneg %p210
      // Predicated region
      $region9: #{tpu_custom_call.1} parent=5 // pred_check
        _
      $region10: #{tpu_custom_call.1} parent=5 // pred_check_branch
        %213 = sbr.rel (%p210) target = $region12
      $region11: #{tpu_custom_call.1} parent=5 // pred_region
        %s214 = ssub.s32 %s22, 1
        // Predicated region
        $region13: #{tpu_custom_call.1} parent=11 // pred_check
          %p215 = pneg %p69
        $region14: #{tpu_custom_call.1} parent=11 // pred_check_branch
          %217 = sbr.rel (%p215) target = $region16
        $region15: #{tpu_custom_call.1} parent=11 // pred_region
          %s219 = ssub.s32 16, 16
          %220 = vsyncadd [#allocation8], %s219
          %s222 = sshll.u32 [#allocation7], 4
          %s223 = int_to_ptr.vmem [resolvable:$true] %s222
          %225 = dma.hbm_to_vmem [thread:$0]  %s1, 16, %s223, [#allocation8]
        $region16: #{tpu_custom_call.1} parent=11 // pred_fallthru
          _
        // Predicated region
        $region17: #{tpu_custom_call.1} parent=11 // pred_check
          %p226 = pneg %p90
        $region18: #{tpu_custom_call.1} parent=11 // pred_check_branch
          %228 = sbr.rel (%p226) target = $region20
        $region19: #{tpu_custom_call.1} parent=11 // pred_region
          %s230 = ssub.s32 16, 16
          %231 = vsyncadd [#allocation8], %s230
          %s233 = sshll.u32 [#allocation9], 4
          %s234 = int_to_ptr.vmem [resolvable:$true] %s233
          %236 = dma.hbm_to_vmem [thread:$0]  %s2, 16, %s234, [#allocation8]
        $region20: #{tpu_custom_call.1} parent=11 // pred_fallthru
          _
        // Predicated region
        $region21: #{tpu_custom_call.1} parent=11 // pred_check
          %p237 = pneg %p111
        $region22: #{tpu_custom_call.1} parent=11 // pred_check_branch
          %239 = sbr.rel (%p237) target = $region24
        $region23: #{tpu_custom_call.1} parent=11 // pred_region
          %s241 = ssub.s32 256, 256
          %242 = vsyncadd [#allocation11], %s241
          %s243 = sshll.u32 [#allocation10], 4
          %s244 = int_to_ptr.vmem [resolvable:$true] %s243
          %249 = dma.hbm_to_vmem [thread:$0]  %s3, 256, %s244, [#allocation11], 64, 64, 4
        $region24: #{tpu_custom_call.1} parent=11 // pred_fallthru
          _
        // Predicated region
        $region25: #{tpu_custom_call.1} parent=11 // pred_check
          %p250 = pneg %p132
        $region26: #{tpu_custom_call.1} parent=11 // pred_check_branch
          %252 = sbr.rel (%p250) target = $region28
        $region27: #{tpu_custom_call.1} parent=11 // pred_region
          %s254 = ssub.s32 16, 16
          %255 = vsyncadd [#allocation11], %s254
          %s257 = sshll.u32 [#allocation12], 4
          %s258 = int_to_ptr.vmem [resolvable:$true] %s257
          %260 = dma.hbm_to_vmem [thread:$0]  %s4, 16, %s258, [#allocation11]
        $region28: #{tpu_custom_call.1} parent=11 // pred_fallthru
          _
        // Predicated region
        $region29: #{tpu_custom_call.1} parent=11 // pred_check
          %p261 = pneg %p153
        $region30: #{tpu_custom_call.1} parent=11 // pred_check_branch
          %263 = sbr.rel (%p261) target = $region32
        $region31: #{tpu_custom_call.1} parent=11 // pred_region
          %s265 = ssub.s32 256, 256
          %266 = vsyncadd [#allocation14], %s265
          %s267 = sshll.u32 [#allocation13], 4
          %s268 = int_to_ptr.vmem [resolvable:$true] %s267
          %273 = dma.hbm_to_vmem [thread:$0]  %s5, 256, %s268, [#allocation14], 64, 64, 4
        $region32: #{tpu_custom_call.1} parent=11 // pred_fallthru
          _
        // Predicated region
        $region33: #{tpu_custom_call.1} parent=11 // pred_check
          %p274 = pneg %p174
        $region34: #{tpu_custom_call.1} parent=11 // pred_check_branch
          %276 = sbr.rel (%p274) target = $region36
        $region35: #{tpu_custom_call.1} parent=11 // pred_region
          %s278 = ssub.s32 16, 16
          %279 = vsyncadd [#allocation14], %s278
          %s281 = sshll.u32 [#allocation15], 4
          %s282 = int_to_ptr.vmem [resolvable:$true] %s281
          %284 = dma.hbm_to_vmem [thread:$0]  %s6, 16, %s282, [#allocation14]
        $region36: #{tpu_custom_call.1} parent=11 // pred_fallthru
          _
      $region12: #{tpu_custom_call.1} parent=5 // pred_fallthru
        _
      %p285 = scmp.lt.s32.totalorder %s22, 2
      // Predicated region
      $region37: #{tpu_custom_call.1} parent=5 // pred_check
        %p286 = pneg %p285
      $region38: #{tpu_custom_call.1} parent=5 // pred_check_branch
        %288 = sbr.rel (%p286) target = $region40
      $region39: #{tpu_custom_call.1} parent=5 // pred_region
        // Predicated region
        $region41: #{tpu_custom_call.1} parent=39 // pred_check
          %p289 = pneg %p42
        $region42: #{tpu_custom_call.1} parent=39 // pred_check_branch
          %291 = sbr.rel (%p289) target = $region44
        $region43: #{tpu_custom_call.1} parent=39 // pred_region
          %s292 = sand.u32 %s32, 1
          %s293 = scalar_lea.sflag [#allocation5], %s292
          %s294 = sand.u32 %s32, 1
          %s295 = smul.addr %s294, 8
          %s296 = scalar_lea.vmem [#allocation4], %s295
          %s298 = ssub.s32 128, 128
          %299 = vsyncadd %s293, %s298
          %s300 = smul.addr %s22, 128
          %s301 = scalar_lea.hbm %s0, %s300
          %s303 = sshll.u32 %s296, 4
          %s304 = int_to_ptr.vmem [resolvable:$true] %s303
          %306 = dma.hbm_to_vmem [thread:$0]  %s301, 128, %s304, %s293
        $region44: #{tpu_custom_call.1} parent=39 // pred_fallthru
          _
      $region40: #{tpu_custom_call.1} parent=5 // pred_fallthru
        _
      %p307 = scmp.le.s32.totalorder 1, %s22
      %p308 = scmp.lt.s32.totalorder %s22, 3
      %p309 = pnand %p307, %p308
      %p310 = pneg %p309
      // Predicated region
      $region45: #{tpu_custom_call.1} parent=5 // pred_check
        _
      $region46: #{tpu_custom_call.1} parent=5 // pred_check_branch
        %312 = sbr.rel (%p309) target = $region48
      $region47: #{tpu_custom_call.1} parent=5 // pred_region
        %s313 = ssub.s32 %s22, 1
        %s314 = sand.u32 %s35, 1
        %s315 = scalar_lea.sflag [#allocation5], %s314
        %s316 = sand.u32 %s35, 1
        %s317 = smul.addr %s316, 8
        %s318 = scalar_lea.vmem [#allocation4], %s317
        // Predicated region
        $region49: #{tpu_custom_call.1} parent=47 // pred_check
          %p319 = pneg %p48
        $region50: #{tpu_custom_call.1} parent=47 // pred_check_branch
          %321 = sbr.rel (%p319) target = $region52
        $region51: #{tpu_custom_call.1} parent=47 // pred_region
          %322 = dma.done %s315, 128
        $region52: #{tpu_custom_call.1} parent=47 // pred_fallthru
          _
        // Predicated region
        $region53: #{tpu_custom_call.1} parent=47 // pred_check
          %p323 = pneg %p69
        $region54: #{tpu_custom_call.1} parent=47 // pred_check_branch
          %325 = sbr.rel (%p323) target = $region56
        $region55: #{tpu_custom_call.1} parent=47 // pred_region
          %326 = dma.done [#allocation8], 16
        $region56: #{tpu_custom_call.1} parent=47 // pred_fallthru
          _
        // Predicated region
        $region57: #{tpu_custom_call.1} parent=47 // pred_check
          %p327 = pneg %p90
        $region58: #{tpu_custom_call.1} parent=47 // pred_check_branch
          %329 = sbr.rel (%p327) target = $region60
        $region59: #{tpu_custom_call.1} parent=47 // pred_region
          %330 = dma.done [#allocation8], 16
        $region60: #{tpu_custom_call.1} parent=47 // pred_fallthru
          _
        // Predicated region
        $region61: #{tpu_custom_call.1} parent=47 // pred_check
          %p331 = pneg %p111
        $region62: #{tpu_custom_call.1} parent=47 // pred_check_branch
          %333 = sbr.rel (%p331) target = $region64
        $region63: #{tpu_custom_call.1} parent=47 // pred_region
          %334 = dma.done [#allocation11], 256
        $region64: #{tpu_custom_call.1} parent=47 // pred_fallthru
          _
        // Predicated region
        $region65: #{tpu_custom_call.1} parent=47 // pred_check
          %p335 = pneg %p132
        $region66: #{tpu_custom_call.1} parent=47 // pred_check_branch
          %337 = sbr.rel (%p335) target = $region68
        $region67: #{tpu_custom_call.1} parent=47 // pred_region
          %338 = dma.done [#allocation11], 16
        $region68: #{tpu_custom_call.1} parent=47 // pred_fallthru
          _
        // Predicated region
        $region69: #{tpu_custom_call.1} parent=47 // pred_check
          %p339 = pneg %p153
        $region70: #{tpu_custom_call.1} parent=47 // pred_check_branch
          %341 = sbr.rel (%p339) target = $region72
        $region71: #{tpu_custom_call.1} parent=47 // pred_region
          %342 = dma.done [#allocation14], 256
        $region72: #{tpu_custom_call.1} parent=47 // pred_fallthru
          _
        // Predicated region
        $region73: #{tpu_custom_call.1} parent=47 // pred_check
          %p343 = pneg %p174
        $region74: #{tpu_custom_call.1} parent=47 // pred_check_branch
          %345 = sbr.rel (%p343) target = $region76
        $region75: #{tpu_custom_call.1} parent=47 // pred_region
          %346 = dma.done [#allocation14], 16
        $region76: #{tpu_custom_call.1} parent=47 // pred_fallthru
          _
        %s347 = sand.u32 %s35, 1
        %s348 = scalar_lea.sflag [#allocation5], %s347
        %s349 = sand.u32 %s35, 1
        %s350 = smul.addr %s349, 8
        %s351 = scalar_lea.vmem [#allocation4], %s350
        %p352 = pneg %p48
        %p353 = pneg %p45
        %p354 = pneg %p69
        %p355 = pneg %p66
        %p356 = pneg %p90
        %p357 = pneg %p87
        %p358 = pneg %p111
        %p359 = pneg %p108
        %p360 = pneg %p132
        %p361 = pneg %p129
        %p362 = pneg %p153
        %p363 = pneg %p150
        %p364 = pneg %p174
        %p365 = pneg %p171
        %p366 = pneg %p200
        %p367 = pneg %p197
        %s368 = sand.u32 %s187, 1
        %s369 = scalar_lea.sflag [#allocation6], %s368
        %s370 = sand.u32 %s187, 1
        %s371 = smul.addr %s370, 8
        %s372 = scalar_lea.vmem [#allocation16], %s371
        %v374 = vld [vmem:[%s318] sm:$0xff]
        %v375 = vld [vmem:[#allocation7] sm:$0x1]
        %v376 = vld [vmem:[#allocation9] sm:$0x1]
        %vm377 = vcmask 261120
        %v378 = vsel %vm377, %v374, 0.0
        %379 = vadd.xlane.f32.xlu0 %v378
        %v380 = vpop.xlane.xlu0 %379
        %v381 = vrcp.pop 32.0
        %v382 = vmul.f32 %v380, %v381
        %v383 = vsub.f32 %v374, %v382
        %v384 = vmul.f32 %v383, %v383
        %v385 = vsel %vm377, %v384, 0.0
        %386 = vadd.xlane.f32.xlu0 %v385
        %v387 = vpop.xlane.xlu0 %386
        %v388 = vmul.f32 %v387, %v381
        %v389 = vadd.f32 %v388, 1e-05
        %v390 = vrsqrt.pop %v389
        %v391 = vmul.f32 %v383, %v390
        %v393 = vlaneseq
        %v394 = vshrl.u32 %v393, 7
        %v395 = vsub.s32 0, %v394
        %v396 = vrot.slane %v375, %v395
        %v398 = vmul.f32 %v391, %v396
        %v400 = vlaneseq
        %v401 = vshrl.u32 %v400, 7
        %v402 = vsub.s32 0, %v401
        %v403 = vrot.slane %v376, %v402
        %v405 = vadd.f32 %v398, %v403
        %v406 = vpack.c.bf16 %v405, %v405
        %v407 = vld [vmem:[#allocation10] sm:$0xf]
        %v408 = vld [vmem:[#allocation10 + $0x4] sm:$0xf]
        %v409 = vld [vmem:[#allocation10 + $0x8] sm:$0xf]
        %v410 = vld [vmem:[#allocation10 + $0xc] sm:$0xf]
        %v411 = vld [vmem:[#allocation12] sm:$0x1]
        %v413 = vlaneseq
        %v414 = vshrl.u32 %v413, 7
        %v415 = vsub.s32 0, %v414
        %v416 = vrot.slane %v411, %v415
        %v422 = vunpack.c.l.b16 %v407
        %v423 = vunpack.c.l.b16 %v408
        %v424 = vunpack.c.l.b16 %v409
        %v425 = vunpack.c.l.b16 %v410
        %v426 = vpack.c.b16 %v423, %v422
        %v427 = vpack.c.b16 %v425, %v424
        %v431 = vsel %vm377, %v406, 0
        %433 = vmatprep.subr.bf16.mxu0 0
        %434 = vmatpush1.bf16.msra.mxu0 %v426
        %435 = vmatprep.subr.bf16.mxu0 0
        %436 = vmatpush1.bf16.msra.mxu0 %v427
        %437 = vmatprep.subr.bf16.mxu0 0
        %438 = vmatpush1.bf16.msra.mxu0 0
        %439 = vmatprep.subr.bf16.mxu0 0
        %440 = vmatpush1.bf16.msra.mxu0 0
        %441 = vmatprep.subr.bf16.mxu0 0
        %442 = vmatpush1.bf16.msra.mxu0 0
        %443 = vmatprep.subr.bf16.mxu0 0
        %444 = vmatpush1.bf16.msra.mxu0 0
        %445 = vmatprep.subr.bf16.mxu0 0
        %446 = vmatpush1.bf16.msra.mxu0 0
        %447 = vmatprep.subr.bf16.mxu0 0
        %448 = vmatpush1.bf16.msra.mxu0 0
        %449 = vmatprep.subr.bf16.mxu0 0
        %450 = vmatpush1.bf16.msra.mxu0 0
        %451 = vmatprep.subr.bf16.mxu0 0
        %452 = vmatpush1.bf16.msra.mxu0 0
        %453 = vmatprep.subr.bf16.mxu0 0
        %454 = vmatpush1.bf16.msra.mxu0 0
        %455 = vmatprep.subr.bf16.mxu0 0
        %456 = vmatpush1.bf16.msra.mxu0 0
        %457 = vmatprep.subr.bf16.mxu0 0
        %458 = vmatpush1.bf16.msra.mxu0 0
        %459 = vmatprep.subr.bf16.mxu0 0
        %460 = vmatpush1.bf16.msra.mxu0 0
        %461 = vmatprep.subr.bf16.mxu0 0
        %462 = vmatpush1.bf16.msra.mxu0 0
        %463 = vmatprep.subr.bf16.mxu0 0
        %464 = vmatpush1.bf16.msra.mxu0 0
        %465 = vmatprep.mubr.bf16.mxu0 0
        %466 = vmatmul.mubr.bf16.gmra.mrb[0].mxu0 %v431
        %v467 = vpop.f32.mrb[0].mxu0
        %v468 = vadd.f32 %v416, %v467
        %v469 = vpop.f32.mrb[0].mxu0
        %v470 = vpop.f32.mrb[0].mxu0
        %v471 = vpop.f32.mrb[0].mxu0
        %472 = vdwg.mxu0
        %v473 = vpack.c.bf16 %v468, %v468
        %vm474 = vcmask 781312
        %475 = vst.msk [vmem:[#allocation2] sm:$0xf] %vm474, %v473
        %v476 = vld [vmem:[#allocation2] sm:$0xf]
        %v478 = vunpack.c.l.b16 %v476
        %v479 = vpack.c.b16 %v478, %v478
        %480 = vrot.lane.b32.xlu0 %v479, 96
        %v481 = vpop.permute.xlu0 %480
        %vm482 = vcmask 64512
        %v484 = vsel %vm482, %v476, 0
        %v487 = vsel %vm482, %v481, 0
        %489 = vmatprep.subr.bf16.mxu0 0
        %490 = vmatpush1.bf16.xpose.msra.mxu0 %v487
        %491 = vmatprep.subr.bf16.mxu0 0
        %492 = vmatpush1.bf16.xpose.msra.mxu0 0
        %493 = vmatprep.subr.bf16.mxu0 0
        %494 = vmatpush1.bf16.xpose.msra.mxu0 0
        %495 = vmatprep.subr.bf16.mxu0 0
        %496 = vmatpush1.bf16.xpose.msra.mxu0 0
        %497 = vmatprep.subr.bf16.mxu0 0
        %498 = vmatpush1.bf16.xpose.msra.mxu0 0
        %499 = vmatprep.subr.bf16.mxu0 0
        %500 = vmatpush1.bf16.xpose.msra.mxu0 0
        %501 = vmatprep.subr.bf16.mxu0 0
        %502 = vmatpush1.bf16.xpose.msra.mxu0 0
        %503 = vmatprep.subr.bf16.mxu0 0
        %504 = vmatpush1.bf16.xpose.msra.mxu0 0
        %505 = vmatprep.subr.bf16.mxu0 0
        %506 = vmatpush1.bf16.xpose.msra.mxu0 0
        %507 = vmatprep.subr.bf16.mxu0 0
        %508 = vmatpush1.bf16.xpose.msra.mxu0 0
        %509 = vmatprep.subr.bf16.mxu0 0
        %510 = vmatpush1.bf16.xpose.msra.mxu0 0
        %511 = vmatprep.subr.bf16.mxu0 0
        %512 = vmatpush1.bf16.xpose.msra.mxu0 0
        %513 = vmatprep.subr.bf16.mxu0 0
        %514 = vmatpush1.bf16.xpose.msra.mxu0 0
        %515 = vmatprep.subr.bf16.mxu0 0
        %516 = vmatpush1.bf16.xpose.msra.mxu0 0
        %517 = vmatprep.subr.bf16.mxu0 0
        %518 = vmatpush1.bf16.xpose.msra.mxu0 0
        %519 = vmatprep.subr.bf16.mxu0 0
        %520 = vmatpush1.bf16.xpose.msra.mxu0 0
        %521 = vmatprep.mubr.bf16.mxu0 0
        %522 = vmatmul.mubr.bf16.gmra.mrb[0].mxu0 %v484
        %v523 = vpop.f32.mrb[0].mxu0
        %v524 = vadd.f32 0.0, %v523
        %v525 = vpop.f32.mrb[0].mxu0
        %v526 = vpop.f32.mrb[0].mxu0
        %v527 = vpop.f32.mrb[0].mxu0
        %528 = vdwg.mxu0
        %v529 = vsel %vm482, %v524, -inf
        %530 = vmax.xlane.f32.xlu0 %v529
        %v531 = vpop.xlane.xlu0 %530
        %v532 = vsub.f32 %v524, %v531
        %v533 = vpack.c.bf16 %v532, %v532
        %v535 = vmul.bf16 %v533, 1069105081
        %v536 = vpow.bf16.pop %v535
        %v537 = vunpack.c.l.bf16 %v536
        %v538 = vsel %vm482, %v537, 0.0
        %539 = vadd.xlane.f32.xlu0 %v538
        %v540 = vpop.xlane.xlu0 %539
        %v541 = vrcp.pop %v540
        %v542 = vpack.c.bf16 %v541, %v541
        %v543 = vmul.bf16 %v536, %v542
        %544 = vrot.lane.b32.xlu0 %v479, 64
        %v545 = vpop.permute.xlu0 %544
        %v547 = vsel %vm482, %v543, 0
        %vm549 = vcmask 1043456
        %v551 = vsel %vm549, %v545, 0
        %553 = vmatprep.subr.bf16.mxu0 0
        %554 = vmatpush1.bf16.msra.mxu0 %v551
        %555 = vmatprep.subr.bf16.mxu0 0
        %556 = vmatpush1.bf16.msra.mxu0 0
        %557 = vmatprep.subr.bf16.mxu0 0
        %558 = vmatpush1.bf16.msra.mxu0 0
        %559 = vmatprep.subr.bf16.mxu0 0
        %560 = vmatpush1.bf16.msra.mxu0 0
        %561 = vmatprep.subr.bf16.mxu0 0
        %562 = vmatpush1.bf16.msra.mxu0 0
        %563 = vmatprep.subr.bf16.mxu0 0
        %564 = vmatpush1.bf16.msra.mxu0 0
        %565 = vmatprep.subr.bf16.mxu0 0
        %566 = vmatpush1.bf16.msra.mxu0 0
        %567 = vmatprep.subr.bf16.mxu0 0
        %568 = vmatpush1.bf16.msra.mxu0 0
        %569 = vmatprep.subr.bf16.mxu0 0
        %570 = vmatpush1.bf16.msra.mxu0 0
        %571 = vmatprep.subr.bf16.mxu0 0
        %572 = vmatpush1.bf16.msra.mxu0 0
        %573 = vmatprep.subr.bf16.mxu0 0
        %574 = vmatpush1.bf16.msra.mxu0 0
        %575 = vmatprep.subr.bf16.mxu0 0
        %576 = vmatpush1.bf16.msra.mxu0 0
        %577 = vmatprep.subr.bf16.mxu0 0
        %578 = vmatpush1.bf16.msra.mxu0 0
        %579 = vmatprep.subr.bf16.mxu0 0
        %580 = vmatpush1.bf16.msra.mxu0 0
        %581 = vmatprep.subr.bf16.mxu0 0
        %582 = vmatpush1.bf16.msra.mxu0 0
        %583 = vmatprep.subr.bf16.mxu0 0
        %584 = vmatpush1.bf16.msra.mxu0 0
        %585 = vmatprep.mubr.bf16.mxu0 0
        %586 = vmatmul.mubr.bf16.gmra.mrb[0].mxu0 %v547
        %v587 = vpop.f32.mrb[0].mxu0
        %v588 = vadd.f32 0.0, %v587
        %v589 = vpop.f32.mrb[0].mxu0
        %v590 = vpop.f32.mrb[0].mxu0
        %v591 = vpop.f32.mrb[0].mxu0
        %592 = vdwg.mxu0
        %v593 = vpack.c.bf16 %v588, %v588
        %vm594 = vcmask 60416
        %595 = vst.msk [vmem:[#allocation3] sm:$0xf] %vm594, %v593
        %v596 = vld [vmem:[#allocation2] sm:$0xf]
        %v598 = vunpack.c.l.b16 %v596
        %v599 = vpack.c.b16 %v598, %v598
        %600 = vrot.lane.b32.xlu0 %v599, 120
        %v601 = vpop.permute.xlu0 %600
        %602 = vrot.lane.b32.xlu0 %v599, 88
        %v603 = vpop.permute.xlu0 %602
        %v605 = vsel %vm482, %v601, 0
        %v608 = vsel %vm482, %v603, 0
        %610 = vmatprep.subr.bf16.mxu0 0
        %611 = vmatpush1.bf16.xpose.msra.mxu0 %v608
        %612 = vmatprep.subr.bf16.mxu0 0
        %613 = vmatpush1.bf16.xpose.msra.mxu0 0
        %614 = vmatprep.subr.bf16.mxu0 0
        %615 = vmatpush1.bf16.xpose.msra.mxu0 0
        %616 = vmatprep.subr.bf16.mxu0 0
        %617 = vmatpush1.bf16.xpose.msra.mxu0 0
        %618 = vmatprep.subr.bf16.mxu0 0
        %619 = vmatpush1.bf16.xpose.msra.mxu0 0
        %620 = vmatprep.subr.bf16.mxu0 0
        %621 = vmatpush1.bf16.xpose.msra.mxu0 0
        %622 = vmatprep.subr.bf16.mxu0 0
        %623 = vmatpush1.bf16.xpose.msra.mxu0 0
        %624 = vmatprep.subr.bf16.mxu0 0
        %625 = vmatpush1.bf16.xpose.msra.mxu0 0
        %626 = vmatprep.subr.bf16.mxu0 0
        %627 = vmatpush1.bf16.xpose.msra.mxu0 0
        %628 = vmatprep.subr.bf16.mxu0 0
        %629 = vmatpush1.bf16.xpose.msra.mxu0 0
        %630 = vmatprep.subr.bf16.mxu0 0
        %631 = vmatpush1.bf16.xpose.msra.mxu0 0
        %632 = vmatprep.subr.bf16.mxu0 0
        %633 = vmatpush1.bf16.xpose.msra.mxu0 0
        %634 = vmatprep.subr.bf16.mxu0 0
        %635 = vmatpush1.bf16.xpose.msra.mxu0 0
        %636 = vmatprep.subr.bf16.mxu0 0
        %637 = vmatpush1.bf16.xpose.msra.mxu0 0
        %638 = vmatprep.subr.bf16.mxu0 0
        %639 = vmatpush1.bf16.xpose.msra.mxu0 0
        %640 = vmatprep.subr.bf16.mxu0 0
        %641 = vmatpush1.bf16.xpose.msra.mxu0 0
        %642 = vmatprep.mubr.bf16.mxu0 0
        %643 = vmatmul.mubr.bf16.gmra.mrb[0].mxu0 %v605
        %v644 = vpop.f32.mrb[0].mxu0
        %v645 = vadd.f32 0.0, %v644
        %v646 = vpop.f32.mrb[0].mxu0
        %v647 = vpop.f32.mrb[0].mxu0
        %v648 = vpop.f32.mrb[0].mxu0
        %649 = vdwg.mxu0
        %v650 = vsel %vm482, %v645, -inf
        %651 = vmax.xlane.f32.xlu0 %v650
        %v652 = vpop.xlane.xlu0 %651
        %v653 = vsub.f32 %v645, %v652
        %v654 = vpack.c.bf16 %v653, %v653
        %v656 = vmul.bf16 %v654, 1069105081
        %v657 = vpow.bf16.pop %v656
        %v658 = vunpack.c.l.bf16 %v657
        %v659 = vsel %vm482, %v658, 0.0
        %660 = vadd.xlane.f32.xlu0 %v659
        %v661 = vpop.xlane.xlu0 %660
        %v662 = vrcp.pop %v661
        %v663 = vpack.c.bf16 %v662, %v662
        %v664 = vmul.bf16 %v657, %v663
        %665 = vrot.lane.b32.xlu0 %v599, 56
        %v666 = vpop.permute.xlu0 %665
        %v668 = vsel %vm482, %v664, 0
        %v671 = vsel %vm549, %v666, 0
        %673 = vmatprep.subr.bf16.mxu0 0
        %674 = vmatpush1.bf16.msra.mxu0 %v671
        %675 = vmatprep.subr.bf16.mxu0 0
        %676 = vmatpush1.bf16.msra.mxu0 0
        %677 = vmatprep.subr.bf16.mxu0 0
        %678 = vmatpush1.bf16.msra.mxu0 0
        %679 = vmatprep.subr.bf16.mxu0 0
        %680 = vmatpush1.bf16.msra.mxu0 0
        %681 = vmatprep.subr.bf16.mxu0 0
        %682 = vmatpush1.bf16.msra.mxu0 0
        %683 = vmatprep.subr.bf16.mxu0 0
        %684 = vmatpush1.bf16.msra.mxu0 0
        %685 = vmatprep.subr.bf16.mxu0 0
        %686 = vmatpush1.bf16.msra.mxu0 0
        %687 = vmatprep.subr.bf16.mxu0 0
        %688 = vmatpush1.bf16.msra.mxu0 0
        %689 = vmatprep.subr.bf16.mxu0 0
        %690 = vmatpush1.bf16.msra.mxu0 0
        %691 = vmatprep.subr.bf16.mxu0 0
        %692 = vmatpush1.bf16.msra.mxu0 0
        %693 = vmatprep.subr.bf16.mxu0 0
        %694 = vmatpush1.bf16.msra.mxu0 0
        %695 = vmatprep.subr.bf16.mxu0 0
        %696 = vmatpush1.bf16.msra.mxu0 0
        %697 = vmatprep.subr.bf16.mxu0 0
        %698 = vmatpush1.bf16.msra.mxu0 0
        %699 = vmatprep.subr.bf16.mxu0 0
        %700 = vmatpush1.bf16.msra.mxu0 0
        %701 = vmatprep.subr.bf16.mxu0 0
        %702 = vmatpush1.bf16.msra.mxu0 0
        %703 = vmatprep.subr.bf16.mxu0 0
        %704 = vmatpush1.bf16.msra.mxu0 0
        %705 = vmatprep.mubr.bf16.mxu0 0
        %706 = vmatmul.mubr.bf16.gmra.mrb[0].mxu0 %v668
        %v707 = vpop.f32.mrb[0].mxu0
        %v708 = vadd.f32 0.0, %v707
        %v709 = vpop.f32.mrb[0].mxu0
        %v710 = vpop.f32.mrb[0].mxu0
        %v711 = vpop.f32.mrb[0].mxu0
        %712 = vdwg.mxu0
        %v713 = vpack.c.bf16 %v708, %v708
        %v715 = vunpack.c.l.b16 %v713
        %v716 = vpack.c.b16 %v715, %v715
        %717 = vrot.lane.b32.xlu0 %v716, 8
        %v718 = vpop.permute.xlu0 %717
        %vm720 = vcmask 126016
        %721 = vst.msk [vmem:[#allocation3] sm:$0xf] %vm720, %v718
        %v722 = vld [vmem:[#allocation2] sm:$0xf]
        %v724 = vunpack.c.l.b16 %v722
        %v725 = vpack.c.b16 %v724, %v724
        %726 = vrot.lane.b32.xlu0 %v725, 112
        %v727 = vpop.permute.xlu0 %726
        %728 = vrot.lane.b32.xlu0 %v725, 80
        %v729 = vpop.permute.xlu0 %728
        %v731 = vsel %vm482, %v727, 0
        %v734 = vsel %vm482, %v729, 0
        %736 = vmatprep.subr.bf16.mxu0 0
        %737 = vmatpush1.bf16.xpose.msra.mxu0 %v734
        %738 = vmatprep.subr.bf16.mxu0 0
        %739 = vmatpush1.bf16.xpose.msra.mxu0 0
        %740 = vmatprep.subr.bf16.mxu0 0
        %741 = vmatpush1.bf16.xpose.msra.mxu0 0
        %742 = vmatprep.subr.bf16.mxu0 0
        %743 = vmatpush1.bf16.xpose.msra.mxu0 0
        %744 = vmatprep.subr.bf16.mxu0 0
        %745 = vmatpush1.bf16.xpose.msra.mxu0 0
        %746 = vmatprep.subr.bf16.mxu0 0
        %747 = vmatpush1.bf16.xpose.msra.mxu0 0
        %748 = vmatprep.subr.bf16.mxu0 0
        %749 = vmatpush1.bf16.xpose.msra.mxu0 0
        %750 = vmatprep.subr.bf16.mxu0 0
        %751 = vmatpush1.bf16.xpose.msra.mxu0 0
        %752 = vmatprep.subr.bf16.mxu0 0
        %753 = vmatpush1.bf16.xpose.msra.mxu0 0
        %754 = vmatprep.subr.bf16.mxu0 0
        %755 = vmatpush1.bf16.xpose.msra.mxu0 0
        %756 = vmatprep.subr.bf16.mxu0 0
        %757 = vmatpush1.bf16.xpose.msra.mxu0 0
        %758 = vmatprep.subr.bf16.mxu0 0
        %759 = vmatpush1.bf16.xpose.msra.mxu0 0
        %760 = vmatprep.subr.bf16.mxu0 0
        %761 = vmatpush1.bf16.xpose.msra.mxu0 0
        %762 = vmatprep.subr.bf16.mxu0 0
        %763 = vmatpush1.bf16.xpose.msra.mxu0 0
        %764 = vmatprep.subr.bf16.mxu0 0
        %765 = vmatpush1.bf16.xpose.msra.mxu0 0
        %766 = vmatprep.subr.bf16.mxu0 0
        %767 = vmatpush1.bf16.xpose.msra.mxu0 0
        %768 = vmatprep.mubr.bf16.mxu0 0
        %769 = vmatmul.mubr.bf16.gmra.mrb[0].mxu0 %v731
        %v770 = vpop.f32.mrb[0].mxu0
        %v771 = vadd.f32 0.0, %v770
        %v772 = vpop.f32.mrb[0].mxu0
        %v773 = vpop.f32.mrb[0].mxu0
        %v774 = vpop.f32.mrb[0].mxu0
        %775 = vdwg.mxu0
        %v776 = vsel %vm482, %v771, -inf
        %777 = vmax.xlane.f32.xlu0 %v776
        %v778 = vpop.xlane.xlu0 %777
        %v779 = vsub.f32 %v771, %v778
        %v780 = vpack.c.bf16 %v779, %v779
        %v782 = vmul.bf16 %v780, 1069105081
        %v783 = vpow.bf16.pop %v782
        %v784 = vunpack.c.l.bf16 %v783
        %v785 = vsel %vm482, %v784, 0.0
        %786 = vadd.xlane.f32.xlu0 %v785
        %v787 = vpop.xlane.xlu0 %786
        %v788 = vrcp.pop %v787
        %v789 = vpack.c.bf16 %v788, %v788
        %v790 = vmul.bf16 %v783, %v789
        %791 = vrot.lane.b32.xlu0 %v725, 48
        %v792 = vpop.permute.xlu0 %791
        %v794 = vsel %vm482, %v790, 0
        %v797 = vsel %vm549, %v792, 0
        %799 = vmatprep.subr.bf16.mxu0 0
        %800 = vmatpush1.bf16.msra.mxu0 %v797
        %801 = vmatprep.subr.bf16.mxu0 0
        %802 = vmatpush1.bf16.msra.mxu0 0
        %803 = vmatprep.subr.bf16.mxu0 0
        %804 = vmatpush1.bf16.msra.mxu0 0
        %805 = vmatprep.subr.bf16.mxu0 0
        %806 = vmatpush1.bf16.msra.mxu0 0
        %807 = vmatprep.subr.bf16.mxu0 0
        %808 = vmatpush1.bf16.msra.mxu0 0
        %809 = vmatprep.subr.bf16.mxu0 0
        %810 = vmatpush1.bf16.msra.mxu0 0
        %811 = vmatprep.subr.bf16.mxu0 0
        %812 = vmatpush1.bf16.msra.mxu0 0
        %813 = vmatprep.subr.bf16.mxu0 0
        %814 = vmatpush1.bf16.msra.mxu0 0
        %815 = vmatprep.subr.bf16.mxu0 0
        %816 = vmatpush1.bf16.msra.mxu0 0
        %817 = vmatprep.subr.bf16.mxu0 0
        %818 = vmatpush1.bf16.msra.mxu0 0
        %819 = vmatprep.subr.bf16.mxu0 0
        %820 = vmatpush1.bf16.msra.mxu0 0
        %821 = vmatprep.subr.bf16.mxu0 0
        %822 = vmatpush1.bf16.msra.mxu0 0
        %823 = vmatprep.subr.bf16.mxu0 0
        %824 = vmatpush1.bf16.msra.mxu0 0
        %825 = vmatprep.subr.bf16.mxu0 0
        %826 = vmatpush1.bf16.msra.mxu0 0
        %827 = vmatprep.subr.bf16.mxu0 0
        %828 = vmatpush1.bf16.msra.mxu0 0
        %829 = vmatprep.subr.bf16.mxu0 0
        %830 = vmatpush1.bf16.msra.mxu0 0
        %831 = vmatprep.mubr.bf16.mxu0 0
        %832 = vmatmul.mubr.bf16.gmra.mrb[0].mxu0 %v794
        %v833 = vpop.f32.mrb[0].mxu0
        %v834 = vadd.f32 0.0, %v833
        %v835 = vpop.f32.mrb[0].mxu0
        %v836 = vpop.f32.mrb[0].mxu0
        %v837 = vpop.f32.mrb[0].mxu0
        %838 = vdwg.mxu0
        %v839 = vpack.c.bf16 %v834, %v834
        %v841 = vunpack.c.l.b16 %v839
        %v842 = vpack.c.b16 %v841, %v841
        %843 = vrot.lane.b32.xlu0 %v842, 16
        %v844 = vpop.permute.xlu0 %843
        %vm846 = vcmask 191616
        %847 = vst.msk [vmem:[#allocation3] sm:$0xf] %vm846, %v844
        %v848 = vld [vmem:[#allocation2] sm:$0xf]
        %v850 = vunpack.c.l.b16 %v848
        %v851 = vpack.c.b16 %v850, %v850
        %852 = vrot.lane.b32.xlu0 %v851, 104
        %v853 = vpop.permute.xlu0 %852
        %854 = vrot.lane.b32.xlu0 %v851, 72
        %v855 = vpop.permute.xlu0 %854
        %v857 = vsel %vm482, %v853, 0
        %v860 = vsel %vm482, %v855, 0
        %862 = vmatprep.subr.bf16.mxu0 0
        %863 = vmatpush1.bf16.xpose.msra.mxu0 %v860
        %864 = vmatprep.subr.bf16.mxu0 0
        %865 = vmatpush1.bf16.xpose.msra.mxu0 0
        %866 = vmatprep.subr.bf16.mxu0 0
        %867 = vmatpush1.bf16.xpose.msra.mxu0 0
        %868 = vmatprep.subr.bf16.mxu0 0
        %869 = vmatpush1.bf16.xpose.msra.mxu0 0
        %870 = vmatprep.subr.bf16.mxu0 0
        %871 = vmatpush1.bf16.xpose.msra.mxu0 0
        %872 = vmatprep.subr.bf16.mxu0 0
        %873 = vmatpush1.bf16.xpose.msra.mxu0 0
        %874 = vmatprep.subr.bf16.mxu0 0
        %875 = vmatpush1.bf16.xpose.msra.mxu0 0
        %876 = vmatprep.subr.bf16.mxu0 0
        %877 = vmatpush1.bf16.xpose.msra.mxu0 0
        %878 = vmatprep.subr.bf16.mxu0 0
        %879 = vmatpush1.bf16.xpose.msra.mxu0 0
        %880 = vmatprep.subr.bf16.mxu0 0
        %881 = vmatpush1.bf16.xpose.msra.mxu0 0
        %882 = vmatprep.subr.bf16.mxu0 0
        %883 = vmatpush1.bf16.xpose.msra.mxu0 0
        %884 = vmatprep.subr.bf16.mxu0 0
        %885 = vmatpush1.bf16.xpose.msra.mxu0 0
        %886 = vmatprep.subr.bf16.mxu0 0
        %887 = vmatpush1.bf16.xpose.msra.mxu0 0
        %888 = vmatprep.subr.bf16.mxu0 0
        %889 = vmatpush1.bf16.xpose.msra.mxu0 0
        %890 = vmatprep.subr.bf16.mxu0 0
        %891 = vmatpush1.bf16.xpose.msra.mxu0 0
        %892 = vmatprep.subr.bf16.mxu0 0
        %893 = vmatpush1.bf16.xpose.msra.mxu0 0
        %894 = vmatprep.mubr.bf16.mxu0 0
        %895 = vmatmul.mubr.bf16.gmra.mrb[0].mxu0 %v857
        %v896 = vpop.f32.mrb[0].mxu0
        %v897 = vadd.f32 0.0, %v896
        %v898 = vpop.f32.mrb[0].mxu0
        %v899 = vpop.f32.mrb[0].mxu0
        %v900 = vpop.f32.mrb[0].mxu0
        %901 = vdwg.mxu0
        %v902 = vsel %vm482, %v897, -inf
        %903 = vmax.xlane.f32.xlu0 %v902
        %v904 = vpop.xlane.xlu0 %903
        %v905 = vsub.f32 %v897, %v904
        %v906 = vpack.c.bf16 %v905, %v905
        %v908 = vmul.bf16 %v906, 1069105081
        %v909 = vpow.bf16.pop %v908
        %v910 = vunpack.c.l.bf16 %v909
        %v911 = vsel %vm482, %v910, 0.0
        %912 = vadd.xlane.f32.xlu0 %v911
        %v913 = vpop.xlane.xlu0 %912
        %v914 = vrcp.pop %v913
        %v915 = vpack.c.bf16 %v914, %v914
        %v916 = vmul.bf16 %v909, %v915
        %917 = vrot.lane.b32.xlu0 %v851, 40
        %v918 = vpop.permute.xlu0 %917
        %v920 = vsel %vm482, %v916, 0
        %v923 = vsel %vm549, %v918, 0
        %925 = vmatprep.subr.bf16.mxu0 0
        %926 = vmatpush1.bf16.msra.mxu0 %v923
        %927 = vmatprep.subr.bf16.mxu0 0
        %928 = vmatpush1.bf16.msra.mxu0 0
        %929 = vmatprep.subr.bf16.mxu0 0
        %930 = vmatpush1.bf16.msra.mxu0 0
        %931 = vmatprep.subr.bf16.mxu0 0
        %932 = vmatpush1.bf16.msra.mxu0 0
        %933 = vmatprep.subr.bf16.mxu0 0
        %934 = vmatpush1.bf16.msra.mxu0 0
        %935 = vmatprep.subr.bf16.mxu0 0
        %936 = vmatpush1.bf16.msra.mxu0 0
        %937 = vmatprep.subr.bf16.mxu0 0
        %938 = vmatpush1.bf16.msra.mxu0 0
        %939 = vmatprep.subr.bf16.mxu0 0
        %940 = vmatpush1.bf16.msra.mxu0 0
        %941 = vmatprep.subr.bf16.mxu0 0
        %942 = vmatpush1.bf16.msra.mxu0 0
        %943 = vmatprep.subr.bf16.mxu0 0
        %944 = vmatpush1.bf16.msra.mxu0 0
        %945 = vmatprep.subr.bf16.mxu0 0
        %946 = vmatpush1.bf16.msra.mxu0 0
        %947 = vmatprep.subr.bf16.mxu0 0
        %948 = vmatpush1.bf16.msra.mxu0 0
        %949 = vmatprep.subr.bf16.mxu0 0
        %950 = vmatpush1.bf16.msra.mxu0 0
        %951 = vmatprep.subr.bf16.mxu0 0
        %952 = vmatpush1.bf16.msra.mxu0 0
        %953 = vmatprep.subr.bf16.mxu0 0
        %954 = vmatpush1.bf16.msra.mxu0 0
        %955 = vmatprep.subr.bf16.mxu0 0
        %956 = vmatpush1.bf16.msra.mxu0 0
        %957 = vmatprep.mubr.bf16.mxu0 0
        %958 = vmatmul.mubr.bf16.gmra.mrb[0].mxu0 %v920
        %v959 = vpop.f32.mrb[0].mxu0
        %v960 = vadd.f32 0.0, %v959
        %v961 = vpop.f32.mrb[0].mxu0
        %v962 = vpop.f32.mrb[0].mxu0
        %v963 = vpop.f32.mrb[0].mxu0
        %964 = vdwg.mxu0
        %v965 = vpack.c.bf16 %v960, %v960
        %v967 = vunpack.c.l.b16 %v965
        %v968 = vpack.c.b16 %v967, %v967
        %969 = vrot.lane.b32.xlu0 %v968, 24
        %v970 = vpop.permute.xlu0 %969
        %vm972 = vcmask 257216
        %973 = vst.msk [vmem:[#allocation3] sm:$0xf] %vm972, %v970
        %v974 = vld [vmem:[#allocation3] sm:$0xf]
        %v975 = vld [vmem:[#allocation13] sm:$0xf]
        %v976 = vld [vmem:[#allocation13 + $0x4] sm:$0xf]
        %v977 = vld [vmem:[#allocation13 + $0x8] sm:$0xf]
        %v978 = vld [vmem:[#allocation13 + $0xc] sm:$0xf]
        %v983 = vunpack.c.l.b16 %v975
        %v984 = vunpack.c.l.b16 %v976
        %v985 = vunpack.c.l.b16 %v977
        %v986 = vunpack.c.l.b16 %v978
        %v987 = vpack.c.b16 %v984, %v983
        %v988 = vpack.c.b16 %v986, %v985
        %v992 = vsel %vm377, %v974, 0
        %994 = vmatprep.subr.bf16.mxu0 0
        %995 = vmatpush1.bf16.msra.mxu0 %v987
        %996 = vmatprep.subr.bf16.mxu0 0
        %997 = vmatpush1.bf16.msra.mxu0 %v988
        %998 = vmatprep.subr.bf16.mxu0 0
        %999 = vmatpush1.bf16.msra.mxu0 0
        %1000 = vmatprep.subr.bf16.mxu0 0
        %1001 = vmatpush1.bf16.msra.mxu0 0
        %1002 = vmatprep.subr.bf16.mxu0 0
        %1003 = vmatpush1.bf16.msra.mxu0 0
        %1004 = vmatprep.subr.bf16.mxu0 0
        %1005 = vmatpush1.bf16.msra.mxu0 0
        %1006 = vmatprep.subr.bf16.mxu0 0
        %1007 = vmatpush1.bf16.msra.mxu0 0
        %1008 = vmatprep.subr.bf16.mxu0 0
        %1009 = vmatpush1.bf16.msra.mxu0 0
        %1010 = vmatprep.subr.bf16.mxu0 0
        %1011 = vmatpush1.bf16.msra.mxu0 0
        %1012 = vmatprep.subr.bf16.mxu0 0
        %1013 = vmatpush1.bf16.msra.mxu0 0
        %1014 = vmatprep.subr.bf16.mxu0 0
        %1015 = vmatpush1.bf16.msra.mxu0 0
        %1016 = vmatprep.subr.bf16.mxu0 0
        %1017 = vmatpush1.bf16.msra.mxu0 0
        %1018 = vmatprep.subr.bf16.mxu0 0
        %1019 = vmatpush1.bf16.msra.mxu0 0
        %1020 = vmatprep.subr.bf16.mxu0 0
        %1021 = vmatpush1.bf16.msra.mxu0 0
        %1022 = vmatprep.subr.bf16.mxu0 0
        %1023 = vmatpush1.bf16.msra.mxu0 0
        %1024 = vmatprep.subr.bf16.mxu0 0
        %1025 = vmatpush1.bf16.msra.mxu0 0
        %1026 = vmatprep.mubr.bf16.mxu0 0
        %1027 = vmatmul.mubr.bf16.gmra.mrb[0].mxu0 %v992
        %v1028 = vpop.f32.mrb[0].mxu0
        %v1029 = vadd.f32 0.0, %v1028
        %v1030 = vpop.f32.mrb[0].mxu0
        %v1031 = vpop.f32.mrb[0].mxu0
        %v1032 = vpop.f32.mrb[0].mxu0
        %1033 = vdwg.mxu0
        %v1034 = vadd.f32 %v374, %v1029
        %v1035 = vld [vmem:[#allocation15] sm:$0x1]
        %v1037 = vlaneseq
        %v1038 = vshrl.u32 %v1037, 7
        %v1039 = vsub.s32 0, %v1038
        %v1040 = vrot.slane %v1035, %v1039
        %v1042 = vadd.f32 %v1034, %v1040
        %1043 = vst.msk [vmem:[%s372] sm:$0xff] %vm377, %v1042
        %s1044 = sand.u32 %s187, 1
        %s1045 = scalar_lea.sflag [#allocation6], %s1044
        %s1046 = sand.u32 %s187, 1
        %s1047 = smul.addr %s1046, 8
        %s1048 = scalar_lea.vmem [#allocation16], %s1047
        // Predicated region
        $region77: #{tpu_custom_call.1} parent=47 // pred_check
          %p1049 = pneg %p197
        $region78: #{tpu_custom_call.1} parent=47 // pred_check_branch
          %1051 = sbr.rel (%p1049) target = $region80
        $region79: #{tpu_custom_call.1} parent=47 // pred_region
          %s1053 = ssub.s32 128, 128
          %1054 = vsyncadd %s1045, %s1053
          %s1055 = smul.addr %s27, 128
          %s1056 = scalar_lea.hbm %s7, %s1055
          %s1058 = sshll.u32 %s1048, 4
          %s1059 = int_to_ptr.vmem [resolvable:$true] %s1058
          %1061 = dma.vmem_to_hbm [thread:$0]  %s1059, 128, %s1056, %s1045
        $region80: #{tpu_custom_call.1} parent=47 // pred_fallthru
          _
      $region48: #{tpu_custom_call.1} parent=5 // pred_fallthru
        _
      %p1062 = scmp.le.s32.totalorder 2, %s22
      // Predicated region
      $region81: #{tpu_custom_call.1} parent=5 // pred_check
        %p1063 = pneg %p1062
      $region82: #{tpu_custom_call.1} parent=5 // pred_check_branch
        %1065 = sbr.rel (%p1063) target = $region84
      $region83: #{tpu_custom_call.1} parent=5 // pred_region
        %s1066 = ssub.s32 %s22, 2
        // Predicated region
        $region85: #{tpu_custom_call.1} parent=83 // pred_check
          %p1067 = pneg %p203
        $region86: #{tpu_custom_call.1} parent=83 // pred_check_branch
          %1069 = sbr.rel (%p1067) target = $region88
        $region87: #{tpu_custom_call.1} parent=83 // pred_region
          %s1070 = sand.u32 %s188, 1
          %s1071 = scalar_lea.sflag [#allocation6], %s1070
          %s1072 = sand.u32 %s188, 1
          %s1073 = smul.addr %s1072, 8
          %s1074 = scalar_lea.vmem [#allocation16], %s1073
          %1075 = dma.done %s1071, 128
        $region88: #{tpu_custom_call.1} parent=83 // pred_fallthru
          _
      $region84: #{tpu_custom_call.1} parent=5 // pred_fallthru
        _
    $region6: #{tpu_custom_call.1} parent=1 // loop_footer
      %s26 = sadd.s32 1, %s22
    $region7: #{tpu_custom_call.1} parent=1 // loop_footer_branch
      %21 = sbr.rel target = $region3
    $region8: #{tpu_custom_call.1} parent=1 // loop_exit
      _
    %1076 = vsyncpa [#allocation5], 1
    %s1077 = scalar_lea.sflag [#allocation5], 1
    %1078 = vsyncpa %s1077, 1
    %1079 = vsyncpa [#allocation8], 1
    %1080 = vsyncpa [#allocation11], 1
    %1081 = vsyncpa [#allocation14], 1
    %1082 = vsyncpa [#allocation6], 1
    %s1083 = scalar_lea.sflag [#allocation6], 1
    %1084 = vsyncpa %s1083, 1

</llo_original>
